<compile_context>
chip_gen: v6e
topology: v6e:2x2x1
jax: 0.10.0
libtpu: 0.0.40
codegen_flags: <defaults>
</compile_context>

<pallas_src>
import jax
import jax.numpy as jnp
from jax import lax
from jax.experimental import pallas as pl
from jax.experimental.pallas import tpu as pltpu


def _round_up(v, m):
    return ((v + m - 1) // m) * m


def _pick_k_tile(d, k_tile):
    """TK near k_tile (multiple of 128); D will be padded UP to a TK multiple."""
    k_tile = max(128, (k_tile // 128) * 128)
    if d <= k_tile:
        return _round_up(d, 128)
    steps = -(-d // k_tile)
    return _round_up(-(-d // steps), 128)


def _vmem_capacity_bytes():
    try:
        info = pltpu.get_tpu_info()
        cap = getattr(info, "vmem_capacity_bytes", None)
        if cap:
            return int(cap)
    except Exception:
        pass
    return 64 << 20  # conservative: v7x per-TensorCore VMEM


def _make_kernel(chunk, num_chunks):
    """Kernel closure over the (static) fc7-epilogue row chunking."""

    def kernel(x_ref, w6_ref, b6_ref, w7_ref, b7_ref, o_ref, acc_ref):
        # x_ref:  (TN, TK)  activations (original dtype; cast per-tile below)
        # w6_ref: (TK, R)   bf16 fc6 weight K-slab
        # b6_ref: (1,  R)   f32 fc6 bias
        # w7_ref: (R,  R)   bf16 fc7 weight (constant index -> resident)
        # b7_ref: (1,  R)   f32 fc7 bias
        # o_ref:  (TN, R)   output tile
        # acc_ref:(TN, R)   f32 fc6 accumulator (persists across the K axis)
        k = pl.program_id(1)

        @pl.when(k == 0)
        def _():
            acc_ref[...] = jnp.zeros_like(acc_ref)

        # fc6 partial product on the MXU; the activation downcast to the MXU
        # dtype happens here (hides under the matmul, no extra HBM pass).
        acc_ref[...] += jnp.dot(x_ref[...].astype(w6_ref.dtype), w6_ref[...],
                                preferred_element_type=jnp.float32)

        @pl.when(k == pl.num_programs(1) - 1)
        def _():
            if num_chunks == 1:
                h = jnp.maximum(acc_ref[...] + b6_ref[...], 0.0)
                y = jnp.dot(h.astype(w7_ref.dtype), w7_ref[...],
                            preferred_element_type=jnp.float32)
                o_ref[...] = jnp.maximum(y + b7_ref[...], 0.0).astype(o_ref.dtype)
            else:
                # Chunk the epilogue over rows to bound live f32/bf16 temps and
                # start fc7 MXU work before the whole tile's bias/ReLU is done.
                def body(c, carry):
                    row = pl.multiple_of(c * chunk, chunk)
                    h = jnp.maximum(acc_ref[pl.ds(row, chunk), :] + b6_ref[...],
                                    0.0)
                    y = jnp.dot(h.astype(w7_ref.dtype), w7_ref[...],
                                preferred_element_type=jnp.float32)
                    o_ref[pl.ds(row, chunk), :] = jnp.maximum(
                        y + b7_ref[...], 0.0).astype(o_ref.dtype)
                    return carry

                lax.fori_loop(0, num_chunks, body, 0, unroll=True)

    return kernel


def prepare_two_mlp_head_params(w6, b6, w7, b7, *, k_tile=1792,
                                matmul_dtype=jnp.bfloat16):
    """Cast / pad the static weights once, outside the per-call path."""
    d, r = w6.shape
    assert w7.shape == (r, r) and b6.shape == (r,) and b7.shape == (r,)
    tk = _pick_k_tile(d, k_tile)
    d_pad = _round_up(d, tk)
    w6m = w6.astype(matmul_dtype)
    if d_pad != d:
        w6m = jnp.pad(w6m, ((0, d_pad - d), (0, 0)))
    return dict(
        w6=w6m,
        w7=w7.astype(matmul_dtype),
        b6=b6.astype(jnp.float32).reshape(1, r),
        b7=b7.astype(jnp.float32).reshape(1, r),
        d=d, d_pad=d_pad, tk=tk, r=r,
    )


def two_mlp_head_apply(x, params, *, batch_tile=None, out_dtype=None,
                       vmem_limit_bytes=None):
    """Apply TwoMLPHead with prepared (pre-cast, pre-padded) weights."""
    n = x.shape[0]
    x2 = x.reshape(n, -1)                        # torch.flatten(start_dim=1)
    d, d_pad, tk, r = params["d"], params["d_pad"], params["tk"], params["r"]
    assert x2.shape[1] == d, "x feature dim does not match fc6 in_channels"
    out_dtype = x.dtype if out_dtype is None else out_dtype

    x_bytes = jnp.dtype(x2.dtype).itemsize
    w_bytes = jnp.dtype(params["w6"].dtype).itemsize
    o_bytes = jnp.dtype(out_dtype).itemsize
    vmem_cap = _vmem_capacity_bytes()

    # ---- batch tile: as large as ~half of VMEM allows (W6 is re-streamed once
    # per batch tile, so TN directly sets W6 HBM traffic). Multiple of 16 for
    # bf16 sublane packing; re-balanced so tiles are even (megacore-friendly).
    n16 = _round_up(n, 16)
    if batch_tile is None:
        budget = int(0.5 * vmem_cap)
        fixed = 2 * tk * r * w_bytes + 2 * r * r * w_bytes + 4 * r * 4
        per_row = 2 * tk * x_bytes + 2 * r * o_bytes + r * 4
        batch_tile = max(128, (budget - fixed) // per_row)
        batch_tile = min(batch_tile, 2048)
    tn = min(_round_up(int(batch_tile), 16), n16)
    num_tiles = -(-n16 // tn)
    tn = _round_up(-(-n16 // num_tiles), 16)     # balance the tiles
    n_pad = num_tiles * tn

    if n_pad != n or d_pad != d:
        x2 = jnp.pad(x2, ((0, n_pad - n), (0, d_pad - d)))

    # ---- fc7 epilogue row chunk (bounds live temps at large TN).
    if tn <= 256:
        chunk = tn
    else:
        chunk = 256
        while tn % chunk:
            chunk //= 2
        chunk = max(chunk, 16)
    num_chunks = tn // chunk

    grid = (n_pad // tn, d_pad // tk)            # reduction (K) axis last

    if vmem_limit_bytes is None:
        resident = (
            2 * tn * tk * x_bytes        # double-buffered x tiles (orig dtype)
            + 2 * tk * r * w_bytes       # double-buffered W6 K-slabs
            + 2 * r * r * w_bytes        # W7 (conservative: 2 bufs)
            + 4 * r * 4                  # biases
            + 2 * tn * r * o_bytes       # double-buffered output tiles
            + tn * r * 4                 # f32 accumulator scratch
            + chunk * r * (8 + w_bytes)  # epilogue temps (h f32, h cast, y f32)
        )
        vmem_limit_bytes = int(resident * 1.25) + (4 << 20)
        vmem_limit_bytes = max(16 << 20,
                               min(vmem_limit_bytes, int(vmem_cap * 0.85)))

    kernel = _make_kernel(chunk, num_chunks)

    def build(single_buffer_replicated):
        rep_kw = ({"pipeline_mode": pl.Buffered(1)}
                  if single_buffer_replicated else {})
        return pl.pallas_call(
            kernel,
            out_shape=jax.ShapeDtypeStruct((n_pad, r), out_dtype),
            grid_spec=pltpu.PrefetchScalarGridSpec(
                num_scalar_prefetch=0,
                grid=grid,
                in_specs=[
                    pl.BlockSpec((tn, tk), lambda i, k: (i, k)),          # x slab
                    pl.BlockSpec((tk, r), lambda i, k: (k, 0)),           # W6 slab
                    pl.BlockSpec((1, r), lambda i, k: (0, 0), **rep_kw),  # b6
                    pl.BlockSpec((r, r), lambda i, k: (0, 0), **rep_kw),  # W7
                    pl.BlockSpec((1, r), lambda i, k: (0, 0), **rep_kw),  # b7
                ],
                out_specs=pl.BlockSpec((tn, r), lambda i, k: (i, 0)),
                scratch_shapes=[pltpu.VMEM((tn, r), jnp.float32)],
            ),
            compiler_params=pltpu.CompilerParams(
                dimension_semantics=("parallel", "arbitrary"),
                vmem_limit_bytes=vmem_limit_bytes,
            ),
        )

    args = (x2, params["w6"], params["b6"], params["w7"], params["b7"])
    try:
        out = build(True)(*args)
    except Exception:
        # pl.Buffered(1) on the replicated blocks is a pure VMEM saving; fall
        # back to default double-buffering if this jax/libtpu rejects it.
        out = build(False)(*args)

    return out[:n]


def two_mlp_head(x, w6, b6, w7, b7, *, k_tile=1792, matmul_dtype=jnp.bfloat16,
                 batch_tile=None, out_dtype=None, vmem_limit_bytes=None):
    """Convenience wrapper: prepare weights + apply. For repeated calls with
    the same weights, call prepare_two_mlp_head_params once and reuse it."""
    params = prepare_two_mlp_head_params(w6, b6, w7, b7, k_tile=k_tile,
                                         matmul_dtype=matmul_dtype)
    return two_mlp_head_apply(x, params, batch_tile=batch_tile,
                              out_dtype=out_dtype,
                              vmem_limit_bytes=vmem_limit_bytes)


def _reference(x, w6, b6, w7, b7, matmul_dtype=jnp.float32):
    """Plain-JAX TwoMLPHead with the same operand precision as the kernel."""
    x2 = x.reshape(x.shape[0], -1).astype(matmul_dtype)
    h = jnp.dot(x2, w6.astype(matmul_dtype),
                preferred_element_type=jnp.float32) + b6.astype(jnp.float32)
    h = jnp.maximum(h, 0.0)
    y = jnp.dot(h.astype(matmul_dtype), w7.astype(matmul_dtype),
                preferred_element_type=jnp.float32) + b7.astype(jnp.float32)
    return jnp.maximum(y, 0.0)


if __name__ == "__main__":
    key = jax.random.PRNGKey(0)
    k_x, k_w6, k_b6, k_w7, k_b7 = jax.random.split(key, 5)

    # Small shapes implied by the module: in_channels = C*H*W, repr size = R.
    N, C, H, W = 8, 4, 16, 16
    D = C * H * W            # in_channels = 1024
    R = 128                  # representation_size

    x = jax.random.normal(k_x, (N, C, H, W), dtype=jnp.float32)
    w6 = jax.random.uniform(k_w6, (D, R), jnp.float32, -1.0, 1.0) / jnp.sqrt(D)
    b6 = jax.random.uniform(k_b6, (R,), jnp.float32, -1.0, 1.0) / jnp.sqrt(D)
    w7 = jax.random.uniform(k_w7, (R, R), jnp.float32, -1.0, 1.0) / jnp.sqrt(R)
    b7 = jax.random.uniform(k_b7, (R,), jnp.float32, -1.0, 1.0) / jnp.sqrt(R)

    out = two_mlp_head(x, w6, b6, w7, b7)
    out = jax.block_until_ready(out)
    assert out.shape == (N, R)

    # Strict check vs a reference mirroring the kernel's bf16 MXU operands.
    ref_bf16 = _reference(x, w6, b6, w7, b7, matmul_dtype=jnp.bfloat16)
    assert jnp.allclose(out, ref_bf16, atol=2e-3, rtol=2e-3), \
        "mismatch vs bf16-operand reference"

    # Loose sanity check vs the full-f32 module semantics.
    ref_f32 = _reference(x, w6, b6, w7, b7, matmul_dtype=jnp.float32)
    assert jnp.allclose(out, ref_f32, atol=1e-1, rtol=1e-1), \
        "mismatch vs f32 reference"

    print("KERNEL_OK")
</pallas_src>

<mosaic_0001>
module attributes {stable_mosaic.version = 11 : i64} {
  func.func @kernel(%arg0: i32, %arg1: i32, %arg2: memref<16x1024xf32, #tpu.memory_space<vmem>>, %arg3: memref<1024x128xbf16, #tpu.memory_space<vmem>>, %arg4: memref<1x128xf32, #tpu.memory_space<vmem>>, %arg5: memref<128x128xbf16, #tpu.memory_space<vmem>>, %arg6: memref<1x128xf32, #tpu.memory_space<vmem>>, %arg7: memref<16x128xf32, #tpu.memory_space<vmem>>, %arg8: memref<16x128xf32, #tpu.memory_space<vmem>>) attributes {dimension_semantics = [#tpu.dimension_semantics<parallel>, #tpu.dimension_semantics<arbitrary>], iteration_bounds = array<i64: 1, 1>, scalar_prefetch = 0 : i64, scratch_operands = 1 : i64, tpu.core_type = #tpu.core_type<tc>, window_params = [{transform_indices = @transform_0, window_bounds = array<i64: 16, 1024>}, {transform_indices = @transform_1, window_bounds = array<i64: 1024, 128>}, {pipeline_mode = #tpu.pipeline_mode<synchronous>, transform_indices = @transform_2, window_bounds = array<i64: 1, 128>}, {pipeline_mode = #tpu.pipeline_mode<synchronous>, transform_indices = @transform_3, window_bounds = array<i64: 128, 128>}, {pipeline_mode = #tpu.pipeline_mode<synchronous>, transform_indices = @transform_4, window_bounds = array<i64: 1, 128>}, {transform_indices = @transform_5, window_bounds = array<i64: 16, 128>}]} {
    %c0_i32 = arith.constant 0 : i32
    %0 = arith.cmpi eq, %arg1, %c0_i32 : i32
    %1 = arith.extui %0 : i1 to i32
    %c0_i32_0 = arith.constant 0 : i32
    %2 = arith.cmpi ne, %1, %c0_i32_0 : i32
    scf.if %2 {
      %cst_10 = arith.constant 0.000000e+00 : f32
      %13 = vector.broadcast %cst_10 : f32 to vector<16x128xf32>
      %c0_11 = arith.constant 0 : index
      %c0_12 = arith.constant 0 : index
      %14 = vector.load %arg8[%c0_11, %c0_12] : memref<16x128xf32, #tpu.memory_space<vmem>>, vector<16x128xf32>
      tpu.vector_store %arg8[%c0_11, %c0_12], %13 {strides = array<i32>} : memref<16x128xf32, #tpu.memory_space<vmem>>, vector<16x128xf32>,
    } else {
    }
    %c0 = arith.constant 0 : index
    %c0_1 = arith.constant 0 : index
    %3 = vector.load %arg8[%c0, %c0_1] : memref<16x128xf32, #tpu.memory_space<vmem>>, vector<16x128xf32>
    %c0_2 = arith.constant 0 : index
    %c0_3 = arith.constant 0 : index
    %4 = vector.load %arg2[%c0_2, %c0_3] : memref<16x1024xf32, #tpu.memory_space<vmem>>, vector<16x1024xf32>
    %5 = arith.truncf %4 : vector<16x1024xf32> to vector<16x1024xbf16>
    %c0_4 = arith.constant 0 : index
    %c0_5 = arith.constant 0 : index
    %6 = vector.load %arg3[%c0_4, %c0_5] : memref<1024x128xbf16, #tpu.memory_space<vmem>>, vector<1024x128xbf16>
    %cst = arith.constant dense<0.000000e+00> : vector<16x128xf32>
    %7 = tpu.matmul %5, %6, %cst {dimension_numbers = #tpu.dot_dimension_numbers<[1], [0], [0], [1], [0, 0, 1, 1], [], []>} : vector<16x1024xbf16>, vector<1024x128xbf16>, vector<16x128xf32> -> vector<16x128xf32>
    %8 = arith.addf %3, %7 : vector<16x128xf32>
    %c0_6 = arith.constant 0 : index
    %c0_7 = arith.constant 0 : index
    %9 = vector.load %arg8[%c0_6, %c0_7] : memref<16x128xf32, #tpu.memory_space<vmem>>, vector<16x128xf32>
    tpu.vector_store %arg8[%c0_6, %c0_7], %8 {strides = array<i32>} : memref<16x128xf32, #tpu.memory_space<vmem>>, vector<16x128xf32>,
    %c0_i32_8 = arith.constant 0 : i32
    %10 = arith.cmpi eq, %arg1, %c0_i32_8 : i32
    %11 = arith.extui %10 : i1 to i32
    %c0_i32_9 = arith.constant 0 : i32
    %12 = arith.cmpi ne, %11, %c0_i32_9 : i32
    scf.if %12 {
      %c0_10 = arith.constant 0 : index
      %c0_11 = arith.constant 0 : index
      %13 = vector.load %arg8[%c0_10, %c0_11] : memref<16x128xf32, #tpu.memory_space<vmem>>, vector<16x128xf32>
      %c0_12 = arith.constant 0 : index
      %c0_13 = arith.constant 0 : index
      %14 = vector.load %arg4[%c0_12, %c0_13] : memref<1x128xf32, #tpu.memory_space<vmem>>, vector<1x128xf32>
      %15 = vector.broadcast %14 : vector<1x128xf32> to vector<16x128xf32>
      %16 = arith.addf %13, %15 : vector<16x128xf32>
      %cst_14 = arith.constant 0.000000e+00 : f32
      %17 = vector.broadcast %cst_14 : f32 to vector<16x128xf32>
      %18 = arith.maximumf %16, %17 : vector<16x128xf32>
      %19 = arith.truncf %18 : vector<16x128xf32> to vector<16x128xbf16>
      %c0_15 = arith.constant 0 : index
      %c0_16 = arith.constant 0 : index
      %20 = vector.load %arg5[%c0_15, %c0_16] : memref<128x128xbf16, #tpu.memory_space<vmem>>, vector<128x128xbf16>
      %cst_17 = arith.constant dense<0.000000e+00> : vector<16x128xf32>
      %21 = tpu.matmul %19, %20, %cst_17 {dimension_numbers = #tpu.dot_dimension_numbers<[1], [0], [0], [1], [0, 0, 1, 1], [], []>} : vector<16x128xbf16>, vector<128x128xbf16>, vector<16x128xf32> -> vector<16x128xf32>
      %c0_18 = arith.constant 0 : index
      %c0_19 = arith.constant 0 : index
      %22 = vector.load %arg6[%c0_18, %c0_19] : memref<1x128xf32, #tpu.memory_space<vmem>>, vector<1x128xf32>
      %23 = vector.broadcast %22 : vector<1x128xf32> to vector<16x128xf32>
      %24 = arith.addf %21, %23 : vector<16x128xf32>
      %cst_20 = arith.constant 0.000000e+00 : f32
      %25 = vector.broadcast %cst_20 : f32 to vector<16x128xf32>
      %26 = arith.maximumf %24, %25 : vector<16x128xf32>
      %c0_21 = arith.constant 0 : index
      %c0_22 = arith.constant 0 : index
      %27 = vector.load %arg7[%c0_21, %c0_22] : memref<16x128xf32, #tpu.memory_space<vmem>>, vector<16x128xf32>
      tpu.vector_store %arg7[%c0_21, %c0_22], %26 {strides = array<i32>} : memref<16x128xf32, #tpu.memory_space<vmem>>, vector<16x128xf32>,
    } else {
    }
    return
  }
  func.func @transform_0(%arg0: i32, %arg1: i32) -> (i32, i32) {
    %c0_i32 = arith.constant 0 : i32
    return %arg0, %arg1 : i32, i32
  }
  func.func @transform_1(%arg0: i32, %arg1: i32) -> (i32, i32) {
    %c0_i32 = arith.constant 0 : i32
    %c0_i32_0 = arith.constant 0 : i32
    return %arg1, %c0_i32 : i32, i32
  }
  func.func @transform_2(%arg0: i32, %arg1: i32) -> (i32, i32) {
    %c0_i32 = arith.constant 0 : i32
    %c0_i32_0 = arith.constant 0 : i32
    %c0_i32_1 = arith.constant 0 : i32
    return %c0_i32, %c0_i32_0 : i32, i32
  }
  func.func @transform_3(%arg0: i32, %arg1: i32) -> (i32, i32) {
    %c0_i32 = arith.constant 0 : i32
    %c0_i32_0 = arith.constant 0 : i32
    %c0_i32_1 = arith.constant 0 : i32
    return %c0_i32, %c0_i32_0 : i32, i32
  }
  func.func @transform_4(%arg0: i32, %arg1: i32) -> (i32, i32) {
    %c0_i32 = arith.constant 0 : i32
    %c0_i32_0 = arith.constant 0 : i32
    %c0_i32_1 = arith.constant 0 : i32
    return %c0_i32, %c0_i32_0 : i32, i32
  }
  func.func @transform_5(%arg0: i32, %arg1: i32) -> (i32, i32) {
    %c0_i32 = arith.constant 0 : i32
    %c0_i32_0 = arith.constant 0 : i32
    return %arg0, %c0_i32 : i32, i32
  }
}

module attributes {stable_mosaic.version = 11 : i64} {
  func.func @kernel(%arg0: i32, %arg1: i32, %arg2: memref<16x1024xf32, #tpu.memory_space<vmem>>, %arg3: memref<1024x128xbf16, #tpu.memory_space<vmem>>, %arg4: memref<1x128xf32, #tpu.memory_space<vmem>>, %arg5: memref<128x128xbf16, #tpu.memory_space<vmem>>, %arg6: memref<1x128xf32, #tpu.memory_space<vmem>>, %arg7: memref<16x128xf32, #tpu.memory_space<vmem>>, %arg8: memref<16x128xf32, #tpu.memory_space<vmem>>) attributes {dimension_semantics = [#tpu.dimension_semantics<parallel>, #tpu.dimension_semantics<arbitrary>], iteration_bounds = array<i64: 1, 1>, scalar_prefetch = 0 : i64, scratch_operands = 1 : i64, tpu.core_type = #tpu.core_type<tc>, window_params = [{transform_indices = @transform_0, window_bounds = array<i64: 16, 1024>}, {transform_indices = @transform_1, window_bounds = array<i64: 1024, 128>}, {pipeline_mode = #tpu.pipeline_mode<synchronous>, transform_indices = @transform_2, window_bounds = array<i64: 1, 128>}, {pipeline_mode = #tpu.pipeline_mode<synchronous>, transform_indices = @transform_3, window_bounds = array<i64: 128, 128>}, {pipeline_mode = #tpu.pipeline_mode<synchronous>, transform_indices = @transform_4, window_bounds = array<i64: 1, 128>}, {transform_indices = @transform_5, window_bounds = array<i64: 16, 128>}]} {
    %c0_i32 = arith.constant 0 : i32
    %0 = arith.cmpi eq, %arg1, %c0_i32 : i32
    %1 = arith.extui %0 : i1 to i32
    %c0_i32_0 = arith.constant 0 : i32
    %2 = arith.cmpi ne, %1, %c0_i32_0 : i32
    scf.if %2 {
      %cst_10 = arith.constant 0.000000e+00 : f32
      %13 = vector.broadcast %cst_10 : f32 to vector<16x128xf32>
      %c0_11 = arith.constant 0 : index
      %c0_12 = arith.constant 0 : index
      %14 = vector.load %arg8[%c0_11, %c0_12] : memref<16x128xf32, #tpu.memory_space<vmem>>, vector<16x128xf32>
      tpu.vector_store %arg8[%c0_11, %c0_12], %13 {strides = array<i32>} : memref<16x128xf32, #tpu.memory_space<vmem>>, vector<16x128xf32>,
    } else {
    }
    %c0 = arith.constant 0 : index
    %c0_1 = arith.constant 0 : index
    %3 = vector.load %arg8[%c0, %c0_1] : memref<16x128xf32, #tpu.memory_space<vmem>>, vector<16x128xf32>
    %c0_2 = arith.constant 0 : index
    %c0_3 = arith.constant 0 : index
    %4 = vector.load %arg2[%c0_2, %c0_3] : memref<16x1024xf32, #tpu.memory_space<vmem>>, vector<16x1024xf32>
    %5 = arith.truncf %4 : vector<16x1024xf32> to vector<16x1024xbf16>
    %c0_4 = arith.constant 0 : index
    %c0_5 = arith.constant 0 : index
    %6 = vector.load %arg3[%c0_4, %c0_5] : memref<1024x128xbf16, #tpu.memory_space<vmem>>, vector<1024x128xbf16>
    %cst = arith.constant dense<0.000000e+00> : vector<16x128xf32>
    %7 = tpu.matmul %5, %6, %cst {dimension_numbers = #tpu.dot_dimension_numbers<[1], [0], [0], [1], [0, 0, 1, 1], [], []>} : vector<16x1024xbf16>, vector<1024x128xbf16>, vector<16x128xf32> -> vector<16x128xf32>
    %8 = arith.addf %3, %7 : vector<16x128xf32>
    %c0_6 = arith.constant 0 : index
    %c0_7 = arith.constant 0 : index
    %9 = vector.load %arg8[%c0_6, %c0_7] : memref<16x128xf32, #tpu.memory_space<vmem>>, vector<16x128xf32>
    tpu.vector_store %arg8[%c0_6, %c0_7], %8 {strides = array<i32>} : memref<16x128xf32, #tpu.memory_space<vmem>>, vector<16x128xf32>,
    %c0_i32_8 = arith.constant 0 : i32
    %10 = arith.cmpi eq, %arg1, %c0_i32_8 : i32
    %11 = arith.extui %10 : i1 to i32
    %c0_i32_9 = arith.constant 0 : i32
    %12 = arith.cmpi ne, %11, %c0_i32_9 : i32
    scf.if %12 {
      %c0_10 = arith.constant 0 : index
      %c0_11 = arith.constant 0 : index
      %13 = vector.load %arg8[%c0_10, %c0_11] : memref<16x128xf32, #tpu.memory_space<vmem>>, vector<16x128xf32>
      %c0_12 = arith.constant 0 : index
      %c0_13 = arith.constant 0 : index
      %14 = vector.load %arg4[%c0_12, %c0_13] : memref<1x128xf32, #tpu.memory_space<vmem>>, vector<1x128xf32>
      %15 = vector.broadcast %14 : vector<1x128xf32> to vector<16x128xf32>
      %16 = arith.addf %13, %15 : vector<16x128xf32>
      %cst_14 = arith.constant 0.000000e+00 : f32
      %17 = vector.broadcast %cst_14 : f32 to vector<16x128xf32>
      %18 = arith.maximumf %16, %17 : vector<16x128xf32>
      %19 = arith.truncf %18 : vector<16x128xf32> to vector<16x128xbf16>
      %c0_15 = arith.constant 0 : index
      %c0_16 = arith.constant 0 : index
      %20 = vector.load %arg5[%c0_15, %c0_16] : memref<128x128xbf16, #tpu.memory_space<vmem>>, vector<128x128xbf16>
      %cst_17 = arith.constant dense<0.000000e+00> : vector<16x128xf32>
      %21 = tpu.matmul %19, %20, %cst_17 {dimension_numbers = #tpu.dot_dimension_numbers<[1], [0], [0], [1], [0, 0, 1, 1], [], []>} : vector<16x128xbf16>, vector<128x128xbf16>, vector<16x128xf32> -> vector<16x128xf32>
      %c0_18 = arith.constant 0 : index
      %c0_19 = arith.constant 0 : index
      %22 = vector.load %arg6[%c0_18, %c0_19] : memref<1x128xf32, #tpu.memory_space<vmem>>, vector<1x128xf32>
      %23 = vector.broadcast %22 : vector<1x128xf32> to vector<16x128xf32>
      %24 = arith.addf %21, %23 : vector<16x128xf32>
      %cst_20 = arith.constant 0.000000e+00 : f32
      %25 = vector.broadcast %cst_20 : f32 to vector<16x128xf32>
      %26 = arith.maximumf %24, %25 : vector<16x128xf32>
      %c0_21 = arith.constant 0 : index
      %c0_22 = arith.constant 0 : index
      %27 = vector.load %arg7[%c0_21, %c0_22] : memref<16x128xf32, #tpu.memory_space<vmem>>, vector<16x128xf32>
      tpu.vector_store %arg7[%c0_21, %c0_22], %26 {strides = array<i32>} : memref<16x128xf32, #tpu.memory_space<vmem>>, vector<16x128xf32>,
    } else {
    }
    return
  }
  func.func @transform_0(%arg0: i32, %arg1: i32) -> (i32, i32) {
    %c0_i32 = arith.constant 0 : i32
    return %arg0, %arg1 : i32, i32
  }
  func.func @transform_1(%arg0: i32, %arg1: i32) -> (i32, i32) {
    %c0_i32 = arith.constant 0 : i32
    %c0_i32_0 = arith.constant 0 : i32
    return %arg1, %c0_i32 : i32, i32
  }
  func.func @transform_2(%arg0: i32, %arg1: i32) -> (i32, i32) {
    %c0_i32 = arith.constant 0 : i32
    %c0_i32_0 = arith.constant 0 : i32
    %c0_i32_1 = arith.constant 0 : i32
    return %c0_i32, %c0_i32_0 : i32, i32
  }
  func.func @transform_3(%arg0: i32, %arg1: i32) -> (i32, i32) {
    %c0_i32 = arith.constant 0 : i32
    %c0_i32_0 = arith.constant 0 : i32
    %c0_i32_1 = arith.constant 0 : i32
    return %c0_i32, %c0_i32_0 : i32, i32
  }
  func.func @transform_4(%arg0: i32, %arg1: i32) -> (i32, i32) {
    %c0_i32 = arith.constant 0 : i32
    %c0_i32_0 = arith.constant 0 : i32
    %c0_i32_1 = arith.constant 0 : i32
    return %c0_i32, %c0_i32_0 : i32, i32
  }
  func.func @transform_5(%arg0: i32, %arg1: i32) -> (i32, i32) {
    %c0_i32 = arith.constant 0 : i32
    %c0_i32_0 = arith.constant 0 : i32
    return %arg0, %c0_i32 : i32, i32
  }
}

</mosaic_0001>

<llo_original>
// kernel: tpu_custom_call.1
$region0: #{tpu_custom_call.1}
  #allocation0 [shape = 'u32[]', space=smem, size = 0x4, offset = 0x4, fixed_abs, tag = 'smem constant byte address 0x4 - core index']
  #allocation1 [shape = 'u32[144,128]{1,0:T(1,128)}', space=vmem, size = 0x12000, scoped, tag = 'internal scratch']
  #allocation2 [shape = 'f32[16,128]{1,0:T(8,128)}', space=vmem, size = 0x2000, scoped, tag = 'scratch operand']
  %s0 = inlined_call_operand.hbm [shape: f32[16,1024], index: 0, kind: input, shape index: {}]
  %s1 = inlined_call_operand.hbm [shape: bf16[1024,128], index: 1, kind: input, shape index: {}]
  %s2 = inlined_call_operand.vmem [shape: f32[1,128], index: 2, kind: input, shape index: {}]
  %s3 = inlined_call_operand.hbm [shape: bf16[128,128], index: 3, kind: input, shape index: {}]
  %s4 = inlined_call_operand.vmem [shape: f32[1,128], index: 4, kind: input, shape index: {}]
  %s5 = inlined_call_operand.hbm [shape: f32[16,128], index: 5, kind: output, shape index: {}]
  %s6 = sld [smem:[#allocation0]]
  $region50: #{tpu_custom_call.1} parent=0
    _
  %s8 = ssub.s32 1, %s6
  %s9 = scalar_select 0, %s8, %s6
  $region1: #{tpu_custom_call.1} parent=0
    #allocation3 [shape = 'u8[65536]{0}', space=vmem, size = 0x10000, scoped, tag = 'input window, operand 0, single buffered']
    #allocation4 [shape = 's32[1]{0}', space=sflag, size = 0x4, scoped, tag = 'scoped memory for tpu_custom_call.1']
    #allocation5 [shape = 's32[1]{0}', space=sflag, size = 0x4, scoped, tag = 'scoped memory for tpu_custom_call.1']
    #allocation6 [shape = 'u8[262144]{0}', space=vmem, size = 0x40000, scoped, tag = 'input window, operand 1, single buffered']
    #allocation7 [shape = 's32[1]{0}', space=sflag, size = 0x4, scoped, tag = 'scoped memory for tpu_custom_call.1']
    #allocation8 [shape = 'u8[32768]{0}', space=vmem, size = 0x8000, scoped, tag = 'input window, operand 3, single buffered']
    #allocation9 [shape = 'u8[8192]{0}', space=vmem, size = 0x2000, scoped, tag = 'output window, operand 0, single buffered']
    %10 = vsyncpa [#allocation4], 0
    %11 = vsyncpa [#allocation7], 0
    %12 = vsyncpa [#allocation5], 0
    // Predicated region
    $region2: #{tpu_custom_call.1} parent=1 // pred_check
      _
    $region3: #{tpu_custom_call.1} parent=1 // pred_check_branch
      %14 = sbr.rel (0) target = $region5
    $region4: #{tpu_custom_call.1} parent=1 // pred_region
      %s16 = ssub.s32 2048, 2048
      %17 = vsyncadd [#allocation4], %s16
      %s18 = sshll.u32 [#allocation3], 4
      %s19 = int_to_ptr.vmem [resolvable:$true] %s18
      %24 = dma.hbm_to_vmem [thread:$0]  %s0, 2048, %s19, [#allocation4], 1024, 1024, 64
    $region5: #{tpu_custom_call.1} parent=1 // pred_fallthru
      _
    // Predicated region
    $region6: #{tpu_custom_call.1} parent=1 // pred_check
      _
    $region7: #{tpu_custom_call.1} parent=1 // pred_check_branch
      %26 = sbr.rel (0) target = $region9
    $region8: #{tpu_custom_call.1} parent=1 // pred_region
      %s28 = ssub.s32 8192, 8192
      %29 = vsyncadd [#allocation7], %s28
      %s30 = sshll.u32 [#allocation6], 4
      %s31 = int_to_ptr.vmem [resolvable:$true] %s30
      %36 = dma.hbm_to_vmem [thread:$0]  %s1, 8192, %s31, [#allocation7], 64, 64, 4
    $region9: #{tpu_custom_call.1} parent=1 // pred_fallthru
      _
    // Predicated region
    $region10: #{tpu_custom_call.1} parent=1 // pred_check
      _
    $region11: #{tpu_custom_call.1} parent=1 // pred_check_branch
      %38 = sbr.rel (0) target = $region13
    $region12: #{tpu_custom_call.1} parent=1 // pred_region
      _
    $region13: #{tpu_custom_call.1} parent=1 // pred_fallthru
      _
    // Predicated region
    $region14: #{tpu_custom_call.1} parent=1 // pred_check
      _
    $region15: #{tpu_custom_call.1} parent=1 // pred_check_branch
      %40 = sbr.rel (0) target = $region17
    $region16: #{tpu_custom_call.1} parent=1 // pred_region
      %s42 = ssub.s32 1024, 1024
      %43 = vsyncadd [#allocation7], %s42
      %s44 = sshll.u32 [#allocation8], 4
      %s45 = int_to_ptr.vmem [resolvable:$true] %s44
      %50 = dma.hbm_to_vmem [thread:$0]  %s3, 1024, %s45, [#allocation7], 64, 64, 4
    $region17: #{tpu_custom_call.1} parent=1 // pred_fallthru
      _
    // Predicated region
    $region18: #{tpu_custom_call.1} parent=1 // pred_check
      _
    $region19: #{tpu_custom_call.1} parent=1 // pred_check_branch
      %52 = sbr.rel (0) target = $region21
    $region20: #{tpu_custom_call.1} parent=1 // pred_region
      _
    $region21: #{tpu_custom_call.1} parent=1 // pred_fallthru
      _
    // Predicated region
    $region22: #{tpu_custom_call.1} parent=1 // pred_check
      _
    $region23: #{tpu_custom_call.1} parent=1 // pred_check_branch
      %54 = sbr.rel (0) target = $region25
    $region24: #{tpu_custom_call.1} parent=1 // pred_region
      %55 = dma.done [#allocation4], 2048
    $region25: #{tpu_custom_call.1} parent=1 // pred_fallthru
      _
    // Predicated region
    $region26: #{tpu_custom_call.1} parent=1 // pred_check
      _
    $region27: #{tpu_custom_call.1} parent=1 // pred_check_branch
      %57 = sbr.rel (0) target = $region29
    $region28: #{tpu_custom_call.1} parent=1 // pred_region
      %58 = dma.done [#allocation7], 8192
    $region29: #{tpu_custom_call.1} parent=1 // pred_fallthru
      _
    // Predicated region
    $region30: #{tpu_custom_call.1} parent=1 // pred_check
      _
    $region31: #{tpu_custom_call.1} parent=1 // pred_check_branch
      %60 = sbr.rel (0) target = $region33
    $region32: #{tpu_custom_call.1} parent=1 // pred_region
      %61 = dma.done [#allocation7], 1024
    $region33: #{tpu_custom_call.1} parent=1 // pred_fallthru
      _
    %p63 = scmp.eq.s32.totalorder 0, 0
    // Predicated region
    $region34: #{tpu_custom_call.1} parent=1 // pred_check
      %p64 = pneg %p63
    $region35: #{tpu_custom_call.1} parent=1 // pred_check_branch
      %66 = sbr.rel (%p64) target = $region37
    $region36: #{tpu_custom_call.1} parent=1 // pred_region
      %67 = vst [vmem:[#allocation2] sm:$0xff] 0.0
      %68 = vst [vmem:[#allocation2 + $0x8] sm:$0xff] 0.0
    $region37: #{tpu_custom_call.1} parent=1 // pred_fallthru
      _
    %v69 = vld [vmem:[#allocation2] sm:$0xff]
    %v70 = vld [vmem:[#allocation2 + $0x8] sm:$0xff]
    %v71 = vld [vmem:[#allocation3] sm:$0xff]
    %v72 = vld [vmem:[#allocation3 + $0x8] sm:$0xff]
    %v73 = vld [vmem:[#allocation3 + $0x10] sm:$0xff]
    %v74 = vld [vmem:[#allocation3 + $0x18] sm:$0xff]
    %v75 = vld [vmem:[#allocation3 + $0x20] sm:$0xff]
    %v76 = vld [vmem:[#allocation3 + $0x28] sm:$0xff]
    %v77 = vld [vmem:[#allocation3 + $0x30] sm:$0xff]
    %v78 = vld [vmem:[#allocation3 + $0x38] sm:$0xff]
    %v79 = vld [vmem:[#allocation3 + $0x40] sm:$0xff]
    %v80 = vld [vmem:[#allocation3 + $0x48] sm:$0xff]
    %v81 = vld [vmem:[#allocation3 + $0x50] sm:$0xff]
    %v82 = vld [vmem:[#allocation3 + $0x58] sm:$0xff]
    %v83 = vld [vmem:[#allocation3 + $0x60] sm:$0xff]
    %v84 = vld [vmem:[#allocation3 + $0x68] sm:$0xff]
    %v85 = vld [vmem:[#allocation3 + $0x70] sm:$0xff]
    %v86 = vld [vmem:[#allocation3 + $0x78] sm:$0xff]
    %v87 = vpack.c.bf16 %v79, %v71
    %v88 = vpack.c.bf16 %v80, %v72
    %v89 = vpack.c.bf16 %v81, %v73
    %v90 = vpack.c.bf16 %v82, %v74
    %v91 = vpack.c.bf16 %v83, %v75
    %v92 = vpack.c.bf16 %v84, %v76
    %v93 = vpack.c.bf16 %v85, %v77
    %v94 = vpack.c.bf16 %v86, %v78
    %v95 = vld [vmem:[#allocation6] sm:$0xf]
    %v96 = vld [vmem:[#allocation6 + $0x4] sm:$0xf]
    %v97 = vld [vmem:[#allocation6 + $0x8] sm:$0xf]
    %v98 = vld [vmem:[#allocation6 + $0xc] sm:$0xf]
    %v99 = vld [vmem:[#allocation6 + $0x10] sm:$0xf]
    %v100 = vld [vmem:[#allocation6 + $0x14] sm:$0xf]
    %v101 = vld [vmem:[#allocation6 + $0x18] sm:$0xf]
    %v102 = vld [vmem:[#allocation6 + $0x1c] sm:$0xf]
    %v103 = vld [vmem:[#allocation6 + $0x20] sm:$0xf]
    %v104 = vld [vmem:[#allocation6 + $0x24] sm:$0xf]
    %v105 = vld [vmem:[#allocation6 + $0x28] sm:$0xf]
    %v106 = vld [vmem:[#allocation6 + $0x2c] sm:$0xf]
    %v107 = vld [vmem:[#allocation6 + $0x30] sm:$0xf]
    %v108 = vld [vmem:[#allocation6 + $0x34] sm:$0xf]
    %v109 = vld [vmem:[#allocation6 + $0x38] sm:$0xf]
    %v110 = vld [vmem:[#allocation6 + $0x3c] sm:$0xf]
    %v111 = vld [vmem:[#allocation6 + $0x40] sm:$0xf]
    %v112 = vld [vmem:[#allocation6 + $0x44] sm:$0xf]
    %v113 = vld [vmem:[#allocation6 + $0x48] sm:$0xf]
    %v114 = vld [vmem:[#allocation6 + $0x4c] sm:$0xf]
    %v115 = vld [vmem:[#allocation6 + $0x50] sm:$0xf]
    %v116 = vld [vmem:[#allocation6 + $0x54] sm:$0xf]
    %v117 = vld [vmem:[#allocation6 + $0x58] sm:$0xf]
    %v118 = vld [vmem:[#allocation6 + $0x5c] sm:$0xf]
    %v119 = vld [vmem:[#allocation6 + $0x60] sm:$0xf]
    %v120 = vld [vmem:[#allocation6 + $0x64] sm:$0xf]
    %v121 = vld [vmem:[#allocation6 + $0x68] sm:$0xf]
    %v122 = vld [vmem:[#allocation6 + $0x6c] sm:$0xf]
    %v123 = vld [vmem:[#allocation6 + $0x70] sm:$0xf]
    %v124 = vld [vmem:[#allocation6 + $0x74] sm:$0xf]
    %v125 = vld [vmem:[#allocation6 + $0x78] sm:$0xf]
    %v126 = vld [vmem:[#allocation6 + $0x7c] sm:$0xf]
    %v127 = vld [vmem:[#allocation6 + $0x80] sm:$0xf]
    %v128 = vld [vmem:[#allocation6 + $0x84] sm:$0xf]
    %v129 = vld [vmem:[#allocation6 + $0x88] sm:$0xf]
    %v130 = vld [vmem:[#allocation6 + $0x8c] sm:$0xf]
    %v131 = vld [vmem:[#allocation6 + $0x90] sm:$0xf]
    %v132 = vld [vmem:[#allocation6 + $0x94] sm:$0xf]
    %v133 = vld [vmem:[#allocation6 + $0x98] sm:$0xf]
    %v134 = vld [vmem:[#allocation6 + $0x9c] sm:$0xf]
    %v135 = vld [vmem:[#allocation6 + $0xa0] sm:$0xf]
    %v136 = vld [vmem:[#allocation6 + $0xa4] sm:$0xf]
    %v137 = vld [vmem:[#allocation6 + $0xa8] sm:$0xf]
    %v138 = vld [vmem:[#allocation6 + $0xac] sm:$0xf]
    %v139 = vld [vmem:[#allocation6 + $0xb0] sm:$0xf]
    %v140 = vld [vmem:[#allocation6 + $0xb4] sm:$0xf]
    %v141 = vld [vmem:[#allocation6 + $0xb8] sm:$0xf]
    %v142 = vld [vmem:[#allocation6 + $0xbc] sm:$0xf]
    %v143 = vld [vmem:[#allocation6 + $0xc0] sm:$0xf]
    %v144 = vld [vmem:[#allocation6 + $0xc4] sm:$0xf]
    %v145 = vld [vmem:[#allocation6 + $0xc8] sm:$0xf]
    %v146 = vld [vmem:[#allocation6 + $0xcc] sm:$0xf]
    %v147 = vld [vmem:[#allocation6 + $0xd0] sm:$0xf]
    %v148 = vld [vmem:[#allocation6 + $0xd4] sm:$0xf]
    %v149 = vld [vmem:[#allocation6 + $0xd8] sm:$0xf]
    %v150 = vld [vmem:[#allocation6 + $0xdc] sm:$0xf]
    %v151 = vld [vmem:[#allocation6 + $0xe0] sm:$0xf]
    %v152 = vld [vmem:[#allocation6 + $0xe4] sm:$0xf]
    %v153 = vld [vmem:[#allocation6 + $0xe8] sm:$0xf]
    %v154 = vld [vmem:[#allocation6 + $0xec] sm:$0xf]
    %v155 = vld [vmem:[#allocation6 + $0xf0] sm:$0xf]
    %v156 = vld [vmem:[#allocation6 + $0xf4] sm:$0xf]
    %v157 = vld [vmem:[#allocation6 + $0xf8] sm:$0xf]
    %v158 = vld [vmem:[#allocation6 + $0xfc] sm:$0xf]
    %v159 = vld [vmem:[#allocation6 + $0x100] sm:$0xf]
    %v160 = vld [vmem:[#allocation6 + $0x104] sm:$0xf]
    %v161 = vld [vmem:[#allocation6 + $0x108] sm:$0xf]
    %v162 = vld [vmem:[#allocation6 + $0x10c] sm:$0xf]
    %v163 = vld [vmem:[#allocation6 + $0x110] sm:$0xf]
    %v164 = vld [vmem:[#allocation6 + $0x114] sm:$0xf]
    %v165 = vld [vmem:[#allocation6 + $0x118] sm:$0xf]
    %v166 = vld [vmem:[#allocation6 + $0x11c] sm:$0xf]
    %v167 = vld [vmem:[#allocation6 + $0x120] sm:$0xf]
    %v168 = vld [vmem:[#allocation6 + $0x124] sm:$0xf]
    %v169 = vld [vmem:[#allocation6 + $0x128] sm:$0xf]
    %v170 = vld [vmem:[#allocation6 + $0x12c] sm:$0xf]
    %v171 = vld [vmem:[#allocation6 + $0x130] sm:$0xf]
    %v172 = vld [vmem:[#allocation6 + $0x134] sm:$0xf]
    %v173 = vld [vmem:[#allocation6 + $0x138] sm:$0xf]
    %v174 = vld [vmem:[#allocation6 + $0x13c] sm:$0xf]
    %v175 = vld [vmem:[#allocation6 + $0x140] sm:$0xf]
    %v176 = vld [vmem:[#allocation6 + $0x144] sm:$0xf]
    %v177 = vld [vmem:[#allocation6 + $0x148] sm:$0xf]
    %v178 = vld [vmem:[#allocation6 + $0x14c] sm:$0xf]
    %v179 = vld [vmem:[#allocation6 + $0x150] sm:$0xf]
    %v180 = vld [vmem:[#allocation6 + $0x154] sm:$0xf]
    %v181 = vld [vmem:[#allocation6 + $0x158] sm:$0xf]
    %v182 = vld [vmem:[#allocation6 + $0x15c] sm:$0xf]
    %v183 = vld [vmem:[#allocation6 + $0x160] sm:$0xf]
    %v184 = vld [vmem:[#allocation6 + $0x164] sm:$0xf]
    %v185 = vld [vmem:[#allocation6 + $0x168] sm:$0xf]
    %v186 = vld [vmem:[#allocation6 + $0x16c] sm:$0xf]
    %v187 = vld [vmem:[#allocation6 + $0x170] sm:$0xf]
    %v188 = vld [vmem:[#allocation6 + $0x174] sm:$0xf]
    %v189 = vld [vmem:[#allocation6 + $0x178] sm:$0xf]
    %v190 = vld [vmem:[#allocation6 + $0x17c] sm:$0xf]
    %v191 = vld [vmem:[#allocation6 + $0x180] sm:$0xf]
    %v192 = vld [vmem:[#allocation6 + $0x184] sm:$0xf]
    %v193 = vld [vmem:[#allocation6 + $0x188] sm:$0xf]
    %v194 = vld [vmem:[#allocation6 + $0x18c] sm:$0xf]
    %v195 = vld [vmem:[#allocation6 + $0x190] sm:$0xf]
    %v196 = vld [vmem:[#allocation6 + $0x194] sm:$0xf]
    %v197 = vld [vmem:[#allocation6 + $0x198] sm:$0xf]
    %v198 = vld [vmem:[#allocation6 + $0x19c] sm:$0xf]
    %v199 = vld [vmem:[#allocation6 + $0x1a0] sm:$0xf]
    %v200 = vld [vmem:[#allocation6 + $0x1a4] sm:$0xf]
    %v201 = vld [vmem:[#allocation6 + $0x1a8] sm:$0xf]
    %v202 = vld [vmem:[#allocation6 + $0x1ac] sm:$0xf]
    %v203 = vld [vmem:[#allocation6 + $0x1b0] sm:$0xf]
    %v204 = vld [vmem:[#allocation6 + $0x1b4] sm:$0xf]
    %v205 = vld [vmem:[#allocation6 + $0x1b8] sm:$0xf]
    %v206 = vld [vmem:[#allocation6 + $0x1bc] sm:$0xf]
    %v207 = vld [vmem:[#allocation6 + $0x1c0] sm:$0xf]
    %v208 = vld [vmem:[#allocation6 + $0x1c4] sm:$0xf]
    %v209 = vld [vmem:[#allocation6 + $0x1c8] sm:$0xf]
    %v210 = vld [vmem:[#allocation6 + $0x1cc] sm:$0xf]
    %v211 = vld [vmem:[#allocation6 + $0x1d0] sm:$0xf]
    %v212 = vld [vmem:[#allocation6 + $0x1d4] sm:$0xf]
    %v213 = vld [vmem:[#allocation6 + $0x1d8] sm:$0xf]
    %v214 = vld [vmem:[#allocation6 + $0x1dc] sm:$0xf]
    %v215 = vld [vmem:[#allocation6 + $0x1e0] sm:$0xf]
    %v216 = vld [vmem:[#allocation6 + $0x1e4] sm:$0xf]
    %v217 = vld [vmem:[#allocation6 + $0x1e8] sm:$0xf]
    %v218 = vld [vmem:[#allocation6 + $0x1ec] sm:$0xf]
    %v219 = vld [vmem:[#allocation6 + $0x1f0] sm:$0xf]
    %v220 = vld [vmem:[#allocation6 + $0x1f4] sm:$0xf]
    %v221 = vld [vmem:[#allocation6 + $0x1f8] sm:$0xf]
    %v222 = vld [vmem:[#allocation6 + $0x1fc] sm:$0xf]
    %v351 = vunpack.c.l.b16 %v95
    %v352 = vunpack.c.l.b16 %v96
    %v353 = vunpack.c.l.b16 %v97
    %v354 = vunpack.c.l.b16 %v98
    %v355 = vunpack.c.l.b16 %v99
    %v356 = vunpack.c.l.b16 %v100
    %v357 = vunpack.c.l.b16 %v101
    %v358 = vunpack.c.l.b16 %v102
    %v359 = vunpack.c.l.b16 %v103
    %v360 = vunpack.c.l.b16 %v104
    %v361 = vunpack.c.l.b16 %v105
    %v362 = vunpack.c.l.b16 %v106
    %v363 = vunpack.c.l.b16 %v107
    %v364 = vunpack.c.l.b16 %v108
    %v365 = vunpack.c.l.b16 %v109
    %v366 = vunpack.c.l.b16 %v110
    %v367 = vunpack.c.l.b16 %v111
    %v368 = vunpack.c.l.b16 %v112
    %v369 = vunpack.c.l.b16 %v113
    %v370 = vunpack.c.l.b16 %v114
    %v371 = vunpack.c.l.b16 %v115
    %v372 = vunpack.c.l.b16 %v116
    %v373 = vunpack.c.l.b16 %v117
    %v374 = vunpack.c.l.b16 %v118
    %v375 = vunpack.c.l.b16 %v119
    %v376 = vunpack.c.l.b16 %v120
    %v377 = vunpack.c.l.b16 %v121
    %v378 = vunpack.c.l.b16 %v122
    %v379 = vunpack.c.l.b16 %v123
    %v380 = vunpack.c.l.b16 %v124
    %v381 = vunpack.c.l.b16 %v125
    %v382 = vunpack.c.l.b16 %v126
    %v383 = vunpack.c.l.b16 %v127
    %v384 = vunpack.c.l.b16 %v128
    %v385 = vunpack.c.l.b16 %v129
    %v386 = vunpack.c.l.b16 %v130
    %v387 = vunpack.c.l.b16 %v131
    %v388 = vunpack.c.l.b16 %v132
    %v389 = vunpack.c.l.b16 %v133
    %v390 = vunpack.c.l.b16 %v134
    %v391 = vunpack.c.l.b16 %v135
    %v392 = vunpack.c.l.b16 %v136
    %v393 = vunpack.c.l.b16 %v137
    %v394 = vunpack.c.l.b16 %v138
    %v395 = vunpack.c.l.b16 %v139
    %v396 = vunpack.c.l.b16 %v140
    %v397 = vunpack.c.l.b16 %v141
    %v398 = vunpack.c.l.b16 %v142
    %v399 = vunpack.c.l.b16 %v143
    %v400 = vunpack.c.l.b16 %v144
    %v401 = vunpack.c.l.b16 %v145
    %v402 = vunpack.c.l.b16 %v146
    %v403 = vunpack.c.l.b16 %v147
    %v404 = vunpack.c.l.b16 %v148
    %v405 = vunpack.c.l.b16 %v149
    %v406 = vunpack.c.l.b16 %v150
    %v407 = vunpack.c.l.b16 %v151
    %v408 = vunpack.c.l.b16 %v152
    %v409 = vunpack.c.l.b16 %v153
    %v410 = vunpack.c.l.b16 %v154
    %v411 = vunpack.c.l.b16 %v155
    %v412 = vunpack.c.l.b16 %v156
    %v413 = vunpack.c.l.b16 %v157
    %v414 = vunpack.c.l.b16 %v158
    %v415 = vunpack.c.l.b16 %v159
    %v416 = vunpack.c.l.b16 %v160
    %v417 = vunpack.c.l.b16 %v161
    %v418 = vunpack.c.l.b16 %v162
    %v419 = vunpack.c.l.b16 %v163
    %v420 = vunpack.c.l.b16 %v164
    %v421 = vunpack.c.l.b16 %v165
    %v422 = vunpack.c.l.b16 %v166
    %v423 = vunpack.c.l.b16 %v167
    %v424 = vunpack.c.l.b16 %v168
    %v425 = vunpack.c.l.b16 %v169
    %v426 = vunpack.c.l.b16 %v170
    %v427 = vunpack.c.l.b16 %v171
    %v428 = vunpack.c.l.b16 %v172
    %v429 = vunpack.c.l.b16 %v173
    %v430 = vunpack.c.l.b16 %v174
    %v431 = vunpack.c.l.b16 %v175
    %v432 = vunpack.c.l.b16 %v176
    %v433 = vunpack.c.l.b16 %v177
    %v434 = vunpack.c.l.b16 %v178
    %v435 = vunpack.c.l.b16 %v179
    %v436 = vunpack.c.l.b16 %v180
    %v437 = vunpack.c.l.b16 %v181
    %v438 = vunpack.c.l.b16 %v182
    %v439 = vunpack.c.l.b16 %v183
    %v440 = vunpack.c.l.b16 %v184
    %v441 = vunpack.c.l.b16 %v185
    %v442 = vunpack.c.l.b16 %v186
    %v443 = vunpack.c.l.b16 %v187
    %v444 = vunpack.c.l.b16 %v188
    %v445 = vunpack.c.l.b16 %v189
    %v446 = vunpack.c.l.b16 %v190
    %v447 = vunpack.c.l.b16 %v191
    %v448 = vunpack.c.l.b16 %v192
    %v449 = vunpack.c.l.b16 %v193
    %v450 = vunpack.c.l.b16 %v194
    %v451 = vunpack.c.l.b16 %v195
    %v452 = vunpack.c.l.b16 %v196
    %v453 = vunpack.c.l.b16 %v197
    %v454 = vunpack.c.l.b16 %v198
    %v455 = vunpack.c.l.b16 %v199
    %v456 = vunpack.c.l.b16 %v200
    %v457 = vunpack.c.l.b16 %v201
    %v458 = vunpack.c.l.b16 %v202
    %v459 = vunpack.c.l.b16 %v203
    %v460 = vunpack.c.l.b16 %v204
    %v461 = vunpack.c.l.b16 %v205
    %v462 = vunpack.c.l.b16 %v206
    %v463 = vunpack.c.l.b16 %v207
    %v464 = vunpack.c.l.b16 %v208
    %v465 = vunpack.c.l.b16 %v209
    %v466 = vunpack.c.l.b16 %v210
    %v467 = vunpack.c.l.b16 %v211
    %v468 = vunpack.c.l.b16 %v212
    %v469 = vunpack.c.l.b16 %v213
    %v470 = vunpack.c.l.b16 %v214
    %v471 = vunpack.c.l.b16 %v215
    %v472 = vunpack.c.l.b16 %v216
    %v473 = vunpack.c.l.b16 %v217
    %v474 = vunpack.c.l.b16 %v218
    %v475 = vunpack.c.l.b16 %v219
    %v476 = vunpack.c.l.b16 %v220
    %v477 = vunpack.c.l.b16 %v221
    %v478 = vunpack.c.l.b16 %v222
    %v479 = vpack.c.b16 %v352, %v351
    %v480 = vpack.c.b16 %v354, %v353
    %v481 = vpack.c.b16 %v356, %v355
    %v482 = vpack.c.b16 %v358, %v357
    %v483 = vpack.c.b16 %v360, %v359
    %v484 = vpack.c.b16 %v362, %v361
    %v485 = vpack.c.b16 %v364, %v363
    %v486 = vpack.c.b16 %v366, %v365
    %v487 = vpack.c.b16 %v368, %v367
    %v488 = vpack.c.b16 %v370, %v369
    %v489 = vpack.c.b16 %v372, %v371
    %v490 = vpack.c.b16 %v374, %v373
    %v491 = vpack.c.b16 %v376, %v375
    %v492 = vpack.c.b16 %v378, %v377
    %v493 = vpack.c.b16 %v380, %v379
    %v494 = vpack.c.b16 %v382, %v381
    %v495 = vpack.c.b16 %v384, %v383
    %v496 = vpack.c.b16 %v386, %v385
    %v497 = vpack.c.b16 %v388, %v387
    %v498 = vpack.c.b16 %v390, %v389
    %v499 = vpack.c.b16 %v392, %v391
    %v500 = vpack.c.b16 %v394, %v393
    %v501 = vpack.c.b16 %v396, %v395
    %v502 = vpack.c.b16 %v398, %v397
    %v503 = vpack.c.b16 %v400, %v399
    %v504 = vpack.c.b16 %v402, %v401
    %v505 = vpack.c.b16 %v404, %v403
    %v506 = vpack.c.b16 %v406, %v405
    %v507 = vpack.c.b16 %v408, %v407
    %v508 = vpack.c.b16 %v410, %v409
    %v509 = vpack.c.b16 %v412, %v411
    %v510 = vpack.c.b16 %v414, %v413
    %v511 = vpack.c.b16 %v416, %v415
    %v512 = vpack.c.b16 %v418, %v417
    %v513 = vpack.c.b16 %v420, %v419
    %v514 = vpack.c.b16 %v422, %v421
    %v515 = vpack.c.b16 %v424, %v423
    %v516 = vpack.c.b16 %v426, %v425
    %v517 = vpack.c.b16 %v428, %v427
    %v518 = vpack.c.b16 %v430, %v429
    %v519 = vpack.c.b16 %v432, %v431
    %v520 = vpack.c.b16 %v434, %v433
    %v521 = vpack.c.b16 %v436, %v435
    %v522 = vpack.c.b16 %v438, %v437
    %v523 = vpack.c.b16 %v440, %v439
    %v524 = vpack.c.b16 %v442, %v441
    %v525 = vpack.c.b16 %v444, %v443
    %v526 = vpack.c.b16 %v446, %v445
    %v527 = vpack.c.b16 %v448, %v447
    %v528 = vpack.c.b16 %v450, %v449
    %v529 = vpack.c.b16 %v452, %v451
    %v530 = vpack.c.b16 %v454, %v453
    %v531 = vpack.c.b16 %v456, %v455
    %v532 = vpack.c.b16 %v458, %v457
    %v533 = vpack.c.b16 %v460, %v459
    %v534 = vpack.c.b16 %v462, %v461
    %v535 = vpack.c.b16 %v464, %v463
    %v536 = vpack.c.b16 %v466, %v465
    %v537 = vpack.c.b16 %v468, %v467
    %v538 = vpack.c.b16 %v470, %v469
    %v539 = vpack.c.b16 %v472, %v471
    %v540 = vpack.c.b16 %v474, %v473
    %v541 = vpack.c.b16 %v476, %v475
    %v542 = vpack.c.b16 %v478, %v477
    %607 = vmatprep.subr.bf16.mxu0 0
    %608 = vmatpush1.bf16.msra.mxu0 %v486
    %609 = vmatprep.subr.bf16.mxu0 0
    %610 = vmatpush1.bf16.msra.mxu0 %v485
    %611 = vmatprep.subr.bf16.mxu0 0
    %612 = vmatpush1.bf16.msra.mxu0 %v484
    %613 = vmatprep.subr.bf16.mxu0 0
    %614 = vmatpush1.bf16.msra.mxu0 %v483
    %615 = vmatprep.subr.bf16.mxu0 0
    %616 = vmatpush1.bf16.msra.mxu0 %v482
    %617 = vmatprep.subr.bf16.mxu0 0
    %618 = vmatpush1.bf16.msra.mxu0 %v481
    %619 = vmatprep.subr.bf16.mxu0 0
    %620 = vmatpush1.bf16.msra.mxu0 %v480
    %621 = vmatprep.subr.bf16.mxu0 0
    %622 = vmatpush1.bf16.msra.mxu0 %v479
    %623 = vmatprep.subr.bf16.mxu0 0
    %624 = vmatpush2.bf16.msra.mxu0 %v494
    %625 = vmatprep.subr.bf16.mxu0 0
    %626 = vmatpush2.bf16.msra.mxu0 %v493
    %627 = vmatprep.subr.bf16.mxu0 0
    %628 = vmatpush2.bf16.msra.mxu0 %v492
    %629 = vmatprep.subr.bf16.mxu0 0
    %630 = vmatpush2.bf16.msra.mxu0 %v491
    %631 = vmatprep.subr.bf16.mxu0 0
    %632 = vmatpush2.bf16.msra.mxu0 %v490
    %633 = vmatprep.subr.bf16.mxu0 0
    %634 = vmatpush2.bf16.msra.mxu0 %v489
    %635 = vmatprep.subr.bf16.mxu0 0
    %636 = vmatpush2.bf16.msra.mxu0 %v488
    %637 = vmatprep.subr.bf16.mxu0 0
    %638 = vmatpush2.bf16.msra.mxu0 %v487
    %639 = vmatprep.mubr.bf16.mxu0 %v88
    %640 = vmatmul.mubr.bf16.gmra.mxu0 %v87
    %v641 = vpop.f32.mrf.mxu0
    %v642 = vadd.f32 0.0, %v641
    %v643 = vpop.f32.mrf.mxu0
    %v644 = vpop.f32.mrf.mxu0
    %v645 = vadd.f32 0.0, %v644
    %v646 = vpop.f32.mrf.mxu0
    %647 = vdwg.mxu0
    %648 = vmatprep.subr.bf16.mxu0 0
    %649 = vmatpush1.bf16.msra.mxu0 %v502
    %650 = vmatprep.subr.bf16.mxu0 0
    %651 = vmatpush1.bf16.msra.mxu0 %v501
    %652 = vmatprep.subr.bf16.mxu0 0
    %653 = vmatpush1.bf16.msra.mxu0 %v500
    %654 = vmatprep.subr.bf16.mxu0 0
    %655 = vmatpush1.bf16.msra.mxu0 %v499
    %656 = vmatprep.subr.bf16.mxu0 0
    %657 = vmatpush1.bf16.msra.mxu0 %v498
    %658 = vmatprep.subr.bf16.mxu0 0
    %659 = vmatpush1.bf16.msra.mxu0 %v497
    %660 = vmatprep.subr.bf16.mxu0 0
    %661 = vmatpush1.bf16.msra.mxu0 %v496
    %662 = vmatprep.subr.bf16.mxu0 0
    %663 = vmatpush1.bf16.msra.mxu0 %v495
    %664 = vmatprep.subr.bf16.mxu0 0
    %665 = vmatpush2.bf16.msra.mxu0 %v510
    %666 = vmatprep.subr.bf16.mxu0 0
    %667 = vmatpush2.bf16.msra.mxu0 %v509
    %668 = vmatprep.subr.bf16.mxu0 0
    %669 = vmatpush2.bf16.msra.mxu0 %v508
    %670 = vmatprep.subr.bf16.mxu0 0
    %671 = vmatpush2.bf16.msra.mxu0 %v507
    %672 = vmatprep.subr.bf16.mxu0 0
    %673 = vmatpush2.bf16.msra.mxu0 %v506
    %674 = vmatprep.subr.bf16.mxu0 0
    %675 = vmatpush2.bf16.msra.mxu0 %v505
    %676 = vmatprep.subr.bf16.mxu0 0
    %677 = vmatpush2.bf16.msra.mxu0 %v504
    %678 = vmatprep.subr.bf16.mxu0 0
    %679 = vmatpush2.bf16.msra.mxu0 %v503
    %680 = vmatprep.mubr.bf16.mxu0 %v90
    %681 = vmatmul.mubr.bf16.gmra.mxu0 %v89
    %v682 = vpop.f32.mrf.mxu0
    %v683 = vadd.f32 %v642, %v682
    %v684 = vpop.f32.mrf.mxu0
    %v685 = vpop.f32.mrf.mxu0
    %v686 = vadd.f32 %v645, %v685
    %v687 = vpop.f32.mrf.mxu0
    %688 = vdwg.mxu0
    %689 = vmatprep.subr.bf16.mxu0 0
    %690 = vmatpush1.bf16.msra.mxu0 %v518
    %691 = vmatprep.subr.bf16.mxu0 0
    %692 = vmatpush1.bf16.msra.mxu0 %v517
    %693 = vmatprep.subr.bf16.mxu0 0
    %694 = vmatpush1.bf16.msra.mxu0 %v516
    %695 = vmatprep.subr.bf16.mxu0 0
    %696 = vmatpush1.bf16.msra.mxu0 %v515
    %697 = vmatprep.subr.bf16.mxu0 0
    %698 = vmatpush1.bf16.msra.mxu0 %v514
    %699 = vmatprep.subr.bf16.mxu0 0
    %700 = vmatpush1.bf16.msra.mxu0 %v513
    %701 = vmatprep.subr.bf16.mxu0 0
    %702 = vmatpush1.bf16.msra.mxu0 %v512
    %703 = vmatprep.subr.bf16.mxu0 0
    %704 = vmatpush1.bf16.msra.mxu0 %v511
    %705 = vmatprep.subr.bf16.mxu0 0
    %706 = vmatpush2.bf16.msra.mxu0 %v526
    %707 = vmatprep.subr.bf16.mxu0 0
    %708 = vmatpush2.bf16.msra.mxu0 %v525
    %709 = vmatprep.subr.bf16.mxu0 0
    %710 = vmatpush2.bf16.msra.mxu0 %v524
    %711 = vmatprep.subr.bf16.mxu0 0
    %712 = vmatpush2.bf16.msra.mxu0 %v523
    %713 = vmatprep.subr.bf16.mxu0 0
    %714 = vmatpush2.bf16.msra.mxu0 %v522
    %715 = vmatprep.subr.bf16.mxu0 0
    %716 = vmatpush2.bf16.msra.mxu0 %v521
    %717 = vmatprep.subr.bf16.mxu0 0
    %718 = vmatpush2.bf16.msra.mxu0 %v520
    %719 = vmatprep.subr.bf16.mxu0 0
    %720 = vmatpush2.bf16.msra.mxu0 %v519
    %721 = vmatprep.mubr.bf16.mxu0 %v92
    %722 = vmatmul.mubr.bf16.gmra.mxu0 %v91
    %v723 = vpop.f32.mrf.mxu0
    %v724 = vadd.f32 %v683, %v723
    %v725 = vpop.f32.mrf.mxu0
    %v726 = vpop.f32.mrf.mxu0
    %v727 = vadd.f32 %v686, %v726
    %v728 = vpop.f32.mrf.mxu0
    %729 = vdwg.mxu0
    %730 = vmatprep.subr.bf16.mxu0 0
    %731 = vmatpush1.bf16.msra.mxu0 %v534
    %732 = vmatprep.subr.bf16.mxu0 0
    %733 = vmatpush1.bf16.msra.mxu0 %v533
    %734 = vmatprep.subr.bf16.mxu0 0
    %735 = vmatpush1.bf16.msra.mxu0 %v532
    %736 = vmatprep.subr.bf16.mxu0 0
    %737 = vmatpush1.bf16.msra.mxu0 %v531
    %738 = vmatprep.subr.bf16.mxu0 0
    %739 = vmatpush1.bf16.msra.mxu0 %v530
    %740 = vmatprep.subr.bf16.mxu0 0
    %741 = vmatpush1.bf16.msra.mxu0 %v529
    %742 = vmatprep.subr.bf16.mxu0 0
    %743 = vmatpush1.bf16.msra.mxu0 %v528
    %744 = vmatprep.subr.bf16.mxu0 0
    %745 = vmatpush1.bf16.msra.mxu0 %v527
    %746 = vmatprep.subr.bf16.mxu0 0
    %747 = vmatpush2.bf16.msra.mxu0 %v542
    %748 = vmatprep.subr.bf16.mxu0 0
    %749 = vmatpush2.bf16.msra.mxu0 %v541
    %750 = vmatprep.subr.bf16.mxu0 0
    %751 = vmatpush2.bf16.msra.mxu0 %v540
    %752 = vmatprep.subr.bf16.mxu0 0
    %753 = vmatpush2.bf16.msra.mxu0 %v539
    %754 = vmatprep.subr.bf16.mxu0 0
    %755 = vmatpush2.bf16.msra.mxu0 %v538
    %756 = vmatprep.subr.bf16.mxu0 0
    %757 = vmatpush2.bf16.msra.mxu0 %v537
    %758 = vmatprep.subr.bf16.mxu0 0
    %759 = vmatpush2.bf16.msra.mxu0 %v536
    %760 = vmatprep.subr.bf16.mxu0 0
    %761 = vmatpush2.bf16.msra.mxu0 %v535
    %762 = vmatprep.mubr.bf16.mxu0 %v94
    %763 = vmatmul.mubr.bf16.gmra.mxu0 %v93
    %v764 = vpop.f32.mrf.mxu0
    %v765 = vadd.f32 %v724, %v764
    %v766 = vpop.f32.mrf.mxu0
    %v767 = vpop.f32.mrf.mxu0
    %v768 = vadd.f32 %v727, %v767
    %v769 = vpop.f32.mrf.mxu0
    %770 = vdwg.mxu0
    %v771 = vadd.f32 %v69, %v765
    %v772 = vadd.f32 %v70, %v768
    %773 = vst [vmem:[#allocation2] sm:$0xff] %v771
    %774 = vst [vmem:[#allocation2 + $0x8] sm:$0xff] %v772
    // Predicated region
    $region38: #{tpu_custom_call.1} parent=1 // pred_check
      %p775 = pneg %p63
    $region39: #{tpu_custom_call.1} parent=1 // pred_check_branch
      %777 = sbr.rel (%p775) target = $region41
    $region40: #{tpu_custom_call.1} parent=1 // pred_region
      %v778 = vld [vmem:[#allocation2] sm:$0xff]
      %v779 = vld [vmem:[#allocation2 + $0x8] sm:$0xff]
      %v780 = vld [vmem:[%s2] sm:$0x1]
      %v782 = vlaneseq
      %v783 = vshrl.u32 %v782, 7
      %v784 = vsub.s32 0, %v783
      %v785 = vrot.slane %v780, %v784
      %v787 = vadd.f32 %v778, %v785
      %v788 = vadd.f32 %v779, %v785
      %v789 = vmax.f32 %v787, 0.0
      %v790 = vmax.f32 %v788, 0.0
      %v791 = vpack.c.bf16 %v790, %v789
      %v792 = vld [vmem:[#allocation8] sm:$0xf]
      %v793 = vld [vmem:[#allocation8 + $0x4] sm:$0xf]
      %v794 = vld [vmem:[#allocation8 + $0x8] sm:$0xf]
      %v795 = vld [vmem:[#allocation8 + $0xc] sm:$0xf]
      %v796 = vld [vmem:[#allocation8 + $0x10] sm:$0xf]
      %v797 = vld [vmem:[#allocation8 + $0x14] sm:$0xf]
      %v798 = vld [vmem:[#allocation8 + $0x18] sm:$0xf]
      %v799 = vld [vmem:[#allocation8 + $0x1c] sm:$0xf]
      %v800 = vld [vmem:[#allocation8 + $0x20] sm:$0xf]
      %v801 = vld [vmem:[#allocation8 + $0x24] sm:$0xf]
      %v802 = vld [vmem:[#allocation8 + $0x28] sm:$0xf]
      %v803 = vld [vmem:[#allocation8 + $0x2c] sm:$0xf]
      %v804 = vld [vmem:[#allocation8 + $0x30] sm:$0xf]
      %v805 = vld [vmem:[#allocation8 + $0x34] sm:$0xf]
      %v806 = vld [vmem:[#allocation8 + $0x38] sm:$0xf]
      %v807 = vld [vmem:[#allocation8 + $0x3c] sm:$0xf]
      %v808 = vld [vmem:[%s4] sm:$0x1]
      %v810 = vlaneseq
      %v811 = vshrl.u32 %v810, 7
      %v812 = vsub.s32 0, %v811
      %v813 = vrot.slane %v808, %v812
      %v831 = vunpack.c.l.b16 %v792
      %v832 = vunpack.c.l.b16 %v793
      %v833 = vunpack.c.l.b16 %v794
      %v834 = vunpack.c.l.b16 %v795
      %v835 = vunpack.c.l.b16 %v796
      %v836 = vunpack.c.l.b16 %v797
      %v837 = vunpack.c.l.b16 %v798
      %v838 = vunpack.c.l.b16 %v799
      %v839 = vunpack.c.l.b16 %v800
      %v840 = vunpack.c.l.b16 %v801
      %v841 = vunpack.c.l.b16 %v802
      %v842 = vunpack.c.l.b16 %v803
      %v843 = vunpack.c.l.b16 %v804
      %v844 = vunpack.c.l.b16 %v805
      %v845 = vunpack.c.l.b16 %v806
      %v846 = vunpack.c.l.b16 %v807
      %v847 = vpack.c.b16 %v832, %v831
      %v848 = vpack.c.b16 %v834, %v833
      %v849 = vpack.c.b16 %v836, %v835
      %v850 = vpack.c.b16 %v838, %v837
      %v851 = vpack.c.b16 %v840, %v839
      %v852 = vpack.c.b16 %v842, %v841
      %v853 = vpack.c.b16 %v844, %v843
      %v854 = vpack.c.b16 %v846, %v845
      %863 = vmatprep.subr.bf16.mxu0 0
      %864 = vmatpush1.bf16.msra.mxu0 %v854
      %865 = vmatprep.subr.bf16.mxu0 0
      %866 = vmatpush1.bf16.msra.mxu0 %v853
      %867 = vmatprep.subr.bf16.mxu0 0
      %868 = vmatpush1.bf16.msra.mxu0 %v852
      %869 = vmatprep.subr.bf16.mxu0 0
      %870 = vmatpush1.bf16.msra.mxu0 %v851
      %871 = vmatprep.subr.bf16.mxu0 0
      %872 = vmatpush1.bf16.msra.mxu0 %v850
      %873 = vmatprep.subr.bf16.mxu0 0
      %874 = vmatpush1.bf16.msra.mxu0 %v849
      %875 = vmatprep.subr.bf16.mxu0 0
      %876 = vmatpush1.bf16.msra.mxu0 %v848
      %877 = vmatprep.subr.bf16.mxu0 0
      %878 = vmatpush1.bf16.msra.mxu0 %v847
      %879 = vmatprep.subr.bf16.mxu0 0
      %880 = vmatpush2.bf16.msra.mxu0 0
      %881 = vmatprep.subr.bf16.mxu0 0
      %882 = vmatpush2.bf16.msra.mxu0 0
      %883 = vmatprep.subr.bf16.mxu0 0
      %884 = vmatpush2.bf16.msra.mxu0 0
      %885 = vmatprep.subr.bf16.mxu0 0
      %886 = vmatpush2.bf16.msra.mxu0 0
      %887 = vmatprep.subr.bf16.mxu0 0
      %888 = vmatpush2.bf16.msra.mxu0 0
      %889 = vmatprep.subr.bf16.mxu0 0
      %890 = vmatpush2.bf16.msra.mxu0 0
      %891 = vmatprep.subr.bf16.mxu0 0
      %892 = vmatpush2.bf16.msra.mxu0 0
      %893 = vmatprep.subr.bf16.mxu0 0
      %894 = vmatpush2.bf16.msra.mxu0 0
      %895 = vmatprep.mubr.bf16.mxu0 0
      %896 = vmatmul.mubr.bf16.gmra.mxu0 %v791
      %v897 = vpop.f32.mrf.mxu0
      %v898 = vadd.f32 %v813, %v897
      %v899 = vpop.f32.mrf.mxu0
      %v900 = vpop.f32.mrf.mxu0
      %v901 = vadd.f32 %v813, %v900
      %v902 = vpop.f32.mrf.mxu0
      %903 = vdwg.mxu0
      %v904 = vmax.f32 %v898, 0.0
      %v905 = vmax.f32 %v901, 0.0
      %906 = vst [vmem:[#allocation9] sm:$0xff] %v904
      %907 = vst [vmem:[#allocation9 + $0x8] sm:$0xff] %v905
    $region41: #{tpu_custom_call.1} parent=1 // pred_fallthru
      _
    // Predicated region
    $region42: #{tpu_custom_call.1} parent=1 // pred_check
      _
    $region43: #{tpu_custom_call.1} parent=1 // pred_check_branch
      %909 = sbr.rel (0) target = $region45
    $region44: #{tpu_custom_call.1} parent=1 // pred_region
      %s911 = ssub.s32 256, 256
      %912 = vsyncadd [#allocation5], %s911
      %s913 = sshll.u32 [#allocation9], 4
      %s914 = int_to_ptr.vmem [resolvable:$true] %s913
      %919 = dma.vmem_to_hbm [thread:$0]  %s914, 256, %s5, [#allocation5], 128, 128, 8
    $region45: #{tpu_custom_call.1} parent=1 // pred_fallthru
      _
    // Predicated region
    $region46: #{tpu_custom_call.1} parent=1 // pred_check
      _
    $region47: #{tpu_custom_call.1} parent=1 // pred_check_branch
      %921 = sbr.rel (0) target = $region49
    $region48: #{tpu_custom_call.1} parent=1 // pred_region
      %922 = dma.done [#allocation5], 256
    $region49: #{tpu_custom_call.1} parent=1 // pred_fallthru
      _
    %923 = vsyncpa [#allocation4], 1
    %924 = vsyncpa [#allocation7], 1
    %925 = vsyncpa [#allocation5], 1

// kernel: tpu_custom_call.1
$region0: #{tpu_custom_call.1}
  #allocation0 [shape = 'u32[]', space=smem, size = 0x4, offset = 0x4, fixed_abs, tag = 'smem constant byte address 0x4 - core index']
  #allocation1 [shape = 'u32[144,128]{1,0:T(1,128)}', space=vmem, size = 0x12000, scoped, tag = 'internal scratch']
  #allocation2 [shape = 'f32[16,128]{1,0:T(8,128)}', space=vmem, size = 0x2000, scoped, tag = 'scratch operand']
  %s0 = inlined_call_operand.hbm [shape: f32[16,1024], index: 0, kind: input, shape index: {}]
  %s1 = inlined_call_operand.hbm [shape: bf16[1024,128], index: 1, kind: input, shape index: {}]
  %s2 = inlined_call_operand.vmem [shape: f32[1,128], index: 2, kind: input, shape index: {}]
  %s3 = inlined_call_operand.hbm [shape: bf16[128,128], index: 3, kind: input, shape index: {}]
  %s4 = inlined_call_operand.vmem [shape: f32[1,128], index: 4, kind: input, shape index: {}]
  %s5 = inlined_call_operand.hbm [shape: f32[16,128], index: 5, kind: output, shape index: {}]
  %s6 = sld [smem:[#allocation0]]
  $region50: #{tpu_custom_call.1} parent=0
    _
  %s8 = ssub.s32 1, %s6
  %s9 = scalar_select 0, %s8, %s6
  $region1: #{tpu_custom_call.1} parent=0
    #allocation3 [shape = 'u8[65536]{0}', space=vmem, size = 0x10000, scoped, tag = 'input window, operand 0, single buffered']
    #allocation4 [shape = 's32[1]{0}', space=sflag, size = 0x4, scoped, tag = 'scoped memory for tpu_custom_call.1']
    #allocation5 [shape = 's32[1]{0}', space=sflag, size = 0x4, scoped, tag = 'scoped memory for tpu_custom_call.1']
    #allocation6 [shape = 'u8[262144]{0}', space=vmem, size = 0x40000, scoped, tag = 'input window, operand 1, single buffered']
    #allocation7 [shape = 's32[1]{0}', space=sflag, size = 0x4, scoped, tag = 'scoped memory for tpu_custom_call.1']
    #allocation8 [shape = 'u8[32768]{0}', space=vmem, size = 0x8000, scoped, tag = 'input window, operand 3, single buffered']
    #allocation9 [shape = 'u8[8192]{0}', space=vmem, size = 0x2000, scoped, tag = 'output window, operand 0, single buffered']
    %10 = vsyncpa [#allocation4], 0
    %11 = vsyncpa [#allocation7], 0
    %12 = vsyncpa [#allocation5], 0
    // Predicated region
    $region2: #{tpu_custom_call.1} parent=1 // pred_check
      _
    $region3: #{tpu_custom_call.1} parent=1 // pred_check_branch
      %14 = sbr.rel (0) target = $region5
    $region4: #{tpu_custom_call.1} parent=1 // pred_region
      %s16 = ssub.s32 2048, 2048
      %17 = vsyncadd [#allocation4], %s16
      %s18 = sshll.u32 [#allocation3], 4
      %s19 = int_to_ptr.vmem [resolvable:$true] %s18
      %24 = dma.hbm_to_vmem [thread:$0]  %s0, 2048, %s19, [#allocation4], 1024, 1024, 64
    $region5: #{tpu_custom_call.1} parent=1 // pred_fallthru
      _
    // Predicated region
    $region6: #{tpu_custom_call.1} parent=1 // pred_check
      _
    $region7: #{tpu_custom_call.1} parent=1 // pred_check_branch
      %26 = sbr.rel (0) target = $region9
    $region8: #{tpu_custom_call.1} parent=1 // pred_region
      %s28 = ssub.s32 8192, 8192
      %29 = vsyncadd [#allocation7], %s28
      %s30 = sshll.u32 [#allocation6], 4
      %s31 = int_to_ptr.vmem [resolvable:$true] %s30
      %36 = dma.hbm_to_vmem [thread:$0]  %s1, 8192, %s31, [#allocation7], 64, 64, 4
    $region9: #{tpu_custom_call.1} parent=1 // pred_fallthru
      _
    // Predicated region
    $region10: #{tpu_custom_call.1} parent=1 // pred_check
      _
    $region11: #{tpu_custom_call.1} parent=1 // pred_check_branch
      %38 = sbr.rel (0) target = $region13
    $region12: #{tpu_custom_call.1} parent=1 // pred_region
      _
    $region13: #{tpu_custom_call.1} parent=1 // pred_fallthru
      _
    // Predicated region
    $region14: #{tpu_custom_call.1} parent=1 // pred_check
      _
    $region15: #{tpu_custom_call.1} parent=1 // pred_check_branch
      %40 = sbr.rel (0) target = $region17
    $region16: #{tpu_custom_call.1} parent=1 // pred_region
      %s42 = ssub.s32 1024, 1024
      %43 = vsyncadd [#allocation7], %s42
      %s44 = sshll.u32 [#allocation8], 4
      %s45 = int_to_ptr.vmem [resolvable:$true] %s44
      %50 = dma.hbm_to_vmem [thread:$0]  %s3, 1024, %s45, [#allocation7], 64, 64, 4
    $region17: #{tpu_custom_call.1} parent=1 // pred_fallthru
      _
    // Predicated region
    $region18: #{tpu_custom_call.1} parent=1 // pred_check
      _
    $region19: #{tpu_custom_call.1} parent=1 // pred_check_branch
      %52 = sbr.rel (0) target = $region21
    $region20: #{tpu_custom_call.1} parent=1 // pred_region
      _
    $region21: #{tpu_custom_call.1} parent=1 // pred_fallthru
      _
    // Predicated region
    $region22: #{tpu_custom_call.1} parent=1 // pred_check
      _
    $region23: #{tpu_custom_call.1} parent=1 // pred_check_branch
      %54 = sbr.rel (0) target = $region25
    $region24: #{tpu_custom_call.1} parent=1 // pred_region
      %55 = dma.done [#allocation4], 2048
    $region25: #{tpu_custom_call.1} parent=1 // pred_fallthru
      _
    // Predicated region
    $region26: #{tpu_custom_call.1} parent=1 // pred_check
      _
    $region27: #{tpu_custom_call.1} parent=1 // pred_check_branch
      %57 = sbr.rel (0) target = $region29
    $region28: #{tpu_custom_call.1} parent=1 // pred_region
      %58 = dma.done [#allocation7], 8192
    $region29: #{tpu_custom_call.1} parent=1 // pred_fallthru
      _
    // Predicated region
    $region30: #{tpu_custom_call.1} parent=1 // pred_check
      _
    $region31: #{tpu_custom_call.1} parent=1 // pred_check_branch
      %60 = sbr.rel (0) target = $region33
    $region32: #{tpu_custom_call.1} parent=1 // pred_region
      %61 = dma.done [#allocation7], 1024
    $region33: #{tpu_custom_call.1} parent=1 // pred_fallthru
      _
    %p63 = scmp.eq.s32.totalorder 0, 0
    // Predicated region
    $region34: #{tpu_custom_call.1} parent=1 // pred_check
      %p64 = pneg %p63
    $region35: #{tpu_custom_call.1} parent=1 // pred_check_branch
      %66 = sbr.rel (%p64) target = $region37
    $region36: #{tpu_custom_call.1} parent=1 // pred_region
      %67 = vst [vmem:[#allocation2] sm:$0xff] 0.0
      %68 = vst [vmem:[#allocation2 + $0x8] sm:$0xff] 0.0
    $region37: #{tpu_custom_call.1} parent=1 // pred_fallthru
      _
    %v69 = vld [vmem:[#allocation2] sm:$0xff]
    %v70 = vld [vmem:[#allocation2 + $0x8] sm:$0xff]
    %v71 = vld [vmem:[#allocation3] sm:$0xff]
    %v72 = vld [vmem:[#allocation3 + $0x8] sm:$0xff]
    %v73 = vld [vmem:[#allocation3 + $0x10] sm:$0xff]
    %v74 = vld [vmem:[#allocation3 + $0x18] sm:$0xff]
    %v75 = vld [vmem:[#allocation3 + $0x20] sm:$0xff]
    %v76 = vld [vmem:[#allocation3 + $0x28] sm:$0xff]
    %v77 = vld [vmem:[#allocation3 + $0x30] sm:$0xff]
    %v78 = vld [vmem:[#allocation3 + $0x38] sm:$0xff]
    %v79 = vld [vmem:[#allocation3 + $0x40] sm:$0xff]
    %v80 = vld [vmem:[#allocation3 + $0x48] sm:$0xff]
    %v81 = vld [vmem:[#allocation3 + $0x50] sm:$0xff]
    %v82 = vld [vmem:[#allocation3 + $0x58] sm:$0xff]
    %v83 = vld [vmem:[#allocation3 + $0x60] sm:$0xff]
    %v84 = vld [vmem:[#allocation3 + $0x68] sm:$0xff]
    %v85 = vld [vmem:[#allocation3 + $0x70] sm:$0xff]
    %v86 = vld [vmem:[#allocation3 + $0x78] sm:$0xff]
    %v87 = vpack.c.bf16 %v79, %v71
    %v88 = vpack.c.bf16 %v80, %v72
    %v89 = vpack.c.bf16 %v81, %v73
    %v90 = vpack.c.bf16 %v82, %v74
    %v91 = vpack.c.bf16 %v83, %v75
    %v92 = vpack.c.bf16 %v84, %v76
    %v93 = vpack.c.bf16 %v85, %v77
    %v94 = vpack.c.bf16 %v86, %v78
    %v95 = vld [vmem:[#allocation6] sm:$0xf]
    %v96 = vld [vmem:[#allocation6 + $0x4] sm:$0xf]
    %v97 = vld [vmem:[#allocation6 + $0x8] sm:$0xf]
    %v98 = vld [vmem:[#allocation6 + $0xc] sm:$0xf]
    %v99 = vld [vmem:[#allocation6 + $0x10] sm:$0xf]
    %v100 = vld [vmem:[#allocation6 + $0x14] sm:$0xf]
    %v101 = vld [vmem:[#allocation6 + $0x18] sm:$0xf]
    %v102 = vld [vmem:[#allocation6 + $0x1c] sm:$0xf]
    %v103 = vld [vmem:[#allocation6 + $0x20] sm:$0xf]
    %v104 = vld [vmem:[#allocation6 + $0x24] sm:$0xf]
    %v105 = vld [vmem:[#allocation6 + $0x28] sm:$0xf]
    %v106 = vld [vmem:[#allocation6 + $0x2c] sm:$0xf]
    %v107 = vld [vmem:[#allocation6 + $0x30] sm:$0xf]
    %v108 = vld [vmem:[#allocation6 + $0x34] sm:$0xf]
    %v109 = vld [vmem:[#allocation6 + $0x38] sm:$0xf]
    %v110 = vld [vmem:[#allocation6 + $0x3c] sm:$0xf]
    %v111 = vld [vmem:[#allocation6 + $0x40] sm:$0xf]
    %v112 = vld [vmem:[#allocation6 + $0x44] sm:$0xf]
    %v113 = vld [vmem:[#allocation6 + $0x48] sm:$0xf]
    %v114 = vld [vmem:[#allocation6 + $0x4c] sm:$0xf]
    %v115 = vld [vmem:[#allocation6 + $0x50] sm:$0xf]
    %v116 = vld [vmem:[#allocation6 + $0x54] sm:$0xf]
    %v117 = vld [vmem:[#allocation6 + $0x58] sm:$0xf]
    %v118 = vld [vmem:[#allocation6 + $0x5c] sm:$0xf]
    %v119 = vld [vmem:[#allocation6 + $0x60] sm:$0xf]
    %v120 = vld [vmem:[#allocation6 + $0x64] sm:$0xf]
    %v121 = vld [vmem:[#allocation6 + $0x68] sm:$0xf]
    %v122 = vld [vmem:[#allocation6 + $0x6c] sm:$0xf]
    %v123 = vld [vmem:[#allocation6 + $0x70] sm:$0xf]
    %v124 = vld [vmem:[#allocation6 + $0x74] sm:$0xf]
    %v125 = vld [vmem:[#allocation6 + $0x78] sm:$0xf]
    %v126 = vld [vmem:[#allocation6 + $0x7c] sm:$0xf]
    %v127 = vld [vmem:[#allocation6 + $0x80] sm:$0xf]
    %v128 = vld [vmem:[#allocation6 + $0x84] sm:$0xf]
    %v129 = vld [vmem:[#allocation6 + $0x88] sm:$0xf]
    %v130 = vld [vmem:[#allocation6 + $0x8c] sm:$0xf]
    %v131 = vld [vmem:[#allocation6 + $0x90] sm:$0xf]
    %v132 = vld [vmem:[#allocation6 + $0x94] sm:$0xf]
    %v133 = vld [vmem:[#allocation6 + $0x98] sm:$0xf]
    %v134 = vld [vmem:[#allocation6 + $0x9c] sm:$0xf]
    %v135 = vld [vmem:[#allocation6 + $0xa0] sm:$0xf]
    %v136 = vld [vmem:[#allocation6 + $0xa4] sm:$0xf]
    %v137 = vld [vmem:[#allocation6 + $0xa8] sm:$0xf]
    %v138 = vld [vmem:[#allocation6 + $0xac] sm:$0xf]
    %v139 = vld [vmem:[#allocation6 + $0xb0] sm:$0xf]
    %v140 = vld [vmem:[#allocation6 + $0xb4] sm:$0xf]
    %v141 = vld [vmem:[#allocation6 + $0xb8] sm:$0xf]
    %v142 = vld [vmem:[#allocation6 + $0xbc] sm:$0xf]
    %v143 = vld [vmem:[#allocation6 + $0xc0] sm:$0xf]
    %v144 = vld [vmem:[#allocation6 + $0xc4] sm:$0xf]
    %v145 = vld [vmem:[#allocation6 + $0xc8] sm:$0xf]
    %v146 = vld [vmem:[#allocation6 + $0xcc] sm:$0xf]
    %v147 = vld [vmem:[#allocation6 + $0xd0] sm:$0xf]
    %v148 = vld [vmem:[#allocation6 + $0xd4] sm:$0xf]
    %v149 = vld [vmem:[#allocation6 + $0xd8] sm:$0xf]
    %v150 = vld [vmem:[#allocation6 + $0xdc] sm:$0xf]
    %v151 = vld [vmem:[#allocation6 + $0xe0] sm:$0xf]
    %v152 = vld [vmem:[#allocation6 + $0xe4] sm:$0xf]
    %v153 = vld [vmem:[#allocation6 + $0xe8] sm:$0xf]
    %v154 = vld [vmem:[#allocation6 + $0xec] sm:$0xf]
    %v155 = vld [vmem:[#allocation6 + $0xf0] sm:$0xf]
    %v156 = vld [vmem:[#allocation6 + $0xf4] sm:$0xf]
    %v157 = vld [vmem:[#allocation6 + $0xf8] sm:$0xf]
    %v158 = vld [vmem:[#allocation6 + $0xfc] sm:$0xf]
    %v159 = vld [vmem:[#allocation6 + $0x100] sm:$0xf]
    %v160 = vld [vmem:[#allocation6 + $0x104] sm:$0xf]
    %v161 = vld [vmem:[#allocation6 + $0x108] sm:$0xf]
    %v162 = vld [vmem:[#allocation6 + $0x10c] sm:$0xf]
    %v163 = vld [vmem:[#allocation6 + $0x110] sm:$0xf]
    %v164 = vld [vmem:[#allocation6 + $0x114] sm:$0xf]
    %v165 = vld [vmem:[#allocation6 + $0x118] sm:$0xf]
    %v166 = vld [vmem:[#allocation6 + $0x11c] sm:$0xf]
    %v167 = vld [vmem:[#allocation6 + $0x120] sm:$0xf]
    %v168 = vld [vmem:[#allocation6 + $0x124] sm:$0xf]
    %v169 = vld [vmem:[#allocation6 + $0x128] sm:$0xf]
    %v170 = vld [vmem:[#allocation6 + $0x12c] sm:$0xf]
    %v171 = vld [vmem:[#allocation6 + $0x130] sm:$0xf]
    %v172 = vld [vmem:[#allocation6 + $0x134] sm:$0xf]
    %v173 = vld [vmem:[#allocation6 + $0x138] sm:$0xf]
    %v174 = vld [vmem:[#allocation6 + $0x13c] sm:$0xf]
    %v175 = vld [vmem:[#allocation6 + $0x140] sm:$0xf]
    %v176 = vld [vmem:[#allocation6 + $0x144] sm:$0xf]
    %v177 = vld [vmem:[#allocation6 + $0x148] sm:$0xf]
    %v178 = vld [vmem:[#allocation6 + $0x14c] sm:$0xf]
    %v179 = vld [vmem:[#allocation6 + $0x150] sm:$0xf]
    %v180 = vld [vmem:[#allocation6 + $0x154] sm:$0xf]
    %v181 = vld [vmem:[#allocation6 + $0x158] sm:$0xf]
    %v182 = vld [vmem:[#allocation6 + $0x15c] sm:$0xf]
    %v183 = vld [vmem:[#allocation6 + $0x160] sm:$0xf]
    %v184 = vld [vmem:[#allocation6 + $0x164] sm:$0xf]
    %v185 = vld [vmem:[#allocation6 + $0x168] sm:$0xf]
    %v186 = vld [vmem:[#allocation6 + $0x16c] sm:$0xf]
    %v187 = vld [vmem:[#allocation6 + $0x170] sm:$0xf]
    %v188 = vld [vmem:[#allocation6 + $0x174] sm:$0xf]
    %v189 = vld [vmem:[#allocation6 + $0x178] sm:$0xf]
    %v190 = vld [vmem:[#allocation6 + $0x17c] sm:$0xf]
    %v191 = vld [vmem:[#allocation6 + $0x180] sm:$0xf]
    %v192 = vld [vmem:[#allocation6 + $0x184] sm:$0xf]
    %v193 = vld [vmem:[#allocation6 + $0x188] sm:$0xf]
    %v194 = vld [vmem:[#allocation6 + $0x18c] sm:$0xf]
    %v195 = vld [vmem:[#allocation6 + $0x190] sm:$0xf]
    %v196 = vld [vmem:[#allocation6 + $0x194] sm:$0xf]
    %v197 = vld [vmem:[#allocation6 + $0x198] sm:$0xf]
    %v198 = vld [vmem:[#allocation6 + $0x19c] sm:$0xf]
    %v199 = vld [vmem:[#allocation6 + $0x1a0] sm:$0xf]
    %v200 = vld [vmem:[#allocation6 + $0x1a4] sm:$0xf]
    %v201 = vld [vmem:[#allocation6 + $0x1a8] sm:$0xf]
    %v202 = vld [vmem:[#allocation6 + $0x1ac] sm:$0xf]
    %v203 = vld [vmem:[#allocation6 + $0x1b0] sm:$0xf]
    %v204 = vld [vmem:[#allocation6 + $0x1b4] sm:$0xf]
    %v205 = vld [vmem:[#allocation6 + $0x1b8] sm:$0xf]
    %v206 = vld [vmem:[#allocation6 + $0x1bc] sm:$0xf]
    %v207 = vld [vmem:[#allocation6 + $0x1c0] sm:$0xf]
    %v208 = vld [vmem:[#allocation6 + $0x1c4] sm:$0xf]
    %v209 = vld [vmem:[#allocation6 + $0x1c8] sm:$0xf]
    %v210 = vld [vmem:[#allocation6 + $0x1cc] sm:$0xf]
    %v211 = vld [vmem:[#allocation6 + $0x1d0] sm:$0xf]
    %v212 = vld [vmem:[#allocation6 + $0x1d4] sm:$0xf]
    %v213 = vld [vmem:[#allocation6 + $0x1d8] sm:$0xf]
    %v214 = vld [vmem:[#allocation6 + $0x1dc] sm:$0xf]
    %v215 = vld [vmem:[#allocation6 + $0x1e0] sm:$0xf]
    %v216 = vld [vmem:[#allocation6 + $0x1e4] sm:$0xf]
    %v217 = vld [vmem:[#allocation6 + $0x1e8] sm:$0xf]
    %v218 = vld [vmem:[#allocation6 + $0x1ec] sm:$0xf]
    %v219 = vld [vmem:[#allocation6 + $0x1f0] sm:$0xf]
    %v220 = vld [vmem:[#allocation6 + $0x1f4] sm:$0xf]
    %v221 = vld [vmem:[#allocation6 + $0x1f8] sm:$0xf]
    %v222 = vld [vmem:[#allocation6 + $0x1fc] sm:$0xf]
    %v351 = vunpack.c.l.b16 %v95
    %v352 = vunpack.c.l.b16 %v96
    %v353 = vunpack.c.l.b16 %v97
    %v354 = vunpack.c.l.b16 %v98
    %v355 = vunpack.c.l.b16 %v99
    %v356 = vunpack.c.l.b16 %v100
    %v357 = vunpack.c.l.b16 %v101
    %v358 = vunpack.c.l.b16 %v102
    %v359 = vunpack.c.l.b16 %v103
    %v360 = vunpack.c.l.b16 %v104
    %v361 = vunpack.c.l.b16 %v105
    %v362 = vunpack.c.l.b16 %v106
    %v363 = vunpack.c.l.b16 %v107
    %v364 = vunpack.c.l.b16 %v108
    %v365 = vunpack.c.l.b16 %v109
    %v366 = vunpack.c.l.b16 %v110
    %v367 = vunpack.c.l.b16 %v111
    %v368 = vunpack.c.l.b16 %v112
    %v369 = vunpack.c.l.b16 %v113
    %v370 = vunpack.c.l.b16 %v114
    %v371 = vunpack.c.l.b16 %v115
    %v372 = vunpack.c.l.b16 %v116
    %v373 = vunpack.c.l.b16 %v117
    %v374 = vunpack.c.l.b16 %v118
    %v375 = vunpack.c.l.b16 %v119
    %v376 = vunpack.c.l.b16 %v120
    %v377 = vunpack.c.l.b16 %v121
    %v378 = vunpack.c.l.b16 %v122
    %v379 = vunpack.c.l.b16 %v123
    %v380 = vunpack.c.l.b16 %v124
    %v381 = vunpack.c.l.b16 %v125
    %v382 = vunpack.c.l.b16 %v126
    %v383 = vunpack.c.l.b16 %v127
    %v384 = vunpack.c.l.b16 %v128
    %v385 = vunpack.c.l.b16 %v129
    %v386 = vunpack.c.l.b16 %v130
    %v387 = vunpack.c.l.b16 %v131
    %v388 = vunpack.c.l.b16 %v132
    %v389 = vunpack.c.l.b16 %v133
    %v390 = vunpack.c.l.b16 %v134
    %v391 = vunpack.c.l.b16 %v135
    %v392 = vunpack.c.l.b16 %v136
    %v393 = vunpack.c.l.b16 %v137
    %v394 = vunpack.c.l.b16 %v138
    %v395 = vunpack.c.l.b16 %v139
    %v396 = vunpack.c.l.b16 %v140
    %v397 = vunpack.c.l.b16 %v141
    %v398 = vunpack.c.l.b16 %v142
    %v399 = vunpack.c.l.b16 %v143
    %v400 = vunpack.c.l.b16 %v144
    %v401 = vunpack.c.l.b16 %v145
    %v402 = vunpack.c.l.b16 %v146
    %v403 = vunpack.c.l.b16 %v147
    %v404 = vunpack.c.l.b16 %v148
    %v405 = vunpack.c.l.b16 %v149
    %v406 = vunpack.c.l.b16 %v150
    %v407 = vunpack.c.l.b16 %v151
    %v408 = vunpack.c.l.b16 %v152
    %v409 = vunpack.c.l.b16 %v153
    %v410 = vunpack.c.l.b16 %v154
    %v411 = vunpack.c.l.b16 %v155
    %v412 = vunpack.c.l.b16 %v156
    %v413 = vunpack.c.l.b16 %v157
    %v414 = vunpack.c.l.b16 %v158
    %v415 = vunpack.c.l.b16 %v159
    %v416 = vunpack.c.l.b16 %v160
    %v417 = vunpack.c.l.b16 %v161
    %v418 = vunpack.c.l.b16 %v162
    %v419 = vunpack.c.l.b16 %v163
    %v420 = vunpack.c.l.b16 %v164
    %v421 = vunpack.c.l.b16 %v165
    %v422 = vunpack.c.l.b16 %v166
    %v423 = vunpack.c.l.b16 %v167
    %v424 = vunpack.c.l.b16 %v168
    %v425 = vunpack.c.l.b16 %v169
    %v426 = vunpack.c.l.b16 %v170
    %v427 = vunpack.c.l.b16 %v171
    %v428 = vunpack.c.l.b16 %v172
    %v429 = vunpack.c.l.b16 %v173
    %v430 = vunpack.c.l.b16 %v174
    %v431 = vunpack.c.l.b16 %v175
    %v432 = vunpack.c.l.b16 %v176
    %v433 = vunpack.c.l.b16 %v177
    %v434 = vunpack.c.l.b16 %v178
    %v435 = vunpack.c.l.b16 %v179
    %v436 = vunpack.c.l.b16 %v180
    %v437 = vunpack.c.l.b16 %v181
    %v438 = vunpack.c.l.b16 %v182
    %v439 = vunpack.c.l.b16 %v183
    %v440 = vunpack.c.l.b16 %v184
    %v441 = vunpack.c.l.b16 %v185
    %v442 = vunpack.c.l.b16 %v186
    %v443 = vunpack.c.l.b16 %v187
    %v444 = vunpack.c.l.b16 %v188
    %v445 = vunpack.c.l.b16 %v189
    %v446 = vunpack.c.l.b16 %v190
    %v447 = vunpack.c.l.b16 %v191
    %v448 = vunpack.c.l.b16 %v192
    %v449 = vunpack.c.l.b16 %v193
    %v450 = vunpack.c.l.b16 %v194
    %v451 = vunpack.c.l.b16 %v195
    %v452 = vunpack.c.l.b16 %v196
    %v453 = vunpack.c.l.b16 %v197
    %v454 = vunpack.c.l.b16 %v198
    %v455 = vunpack.c.l.b16 %v199
    %v456 = vunpack.c.l.b16 %v200
    %v457 = vunpack.c.l.b16 %v201
    %v458 = vunpack.c.l.b16 %v202
    %v459 = vunpack.c.l.b16 %v203
    %v460 = vunpack.c.l.b16 %v204
    %v461 = vunpack.c.l.b16 %v205
    %v462 = vunpack.c.l.b16 %v206
    %v463 = vunpack.c.l.b16 %v207
    %v464 = vunpack.c.l.b16 %v208
    %v465 = vunpack.c.l.b16 %v209
    %v466 = vunpack.c.l.b16 %v210
    %v467 = vunpack.c.l.b16 %v211
    %v468 = vunpack.c.l.b16 %v212
    %v469 = vunpack.c.l.b16 %v213
    %v470 = vunpack.c.l.b16 %v214
    %v471 = vunpack.c.l.b16 %v215
    %v472 = vunpack.c.l.b16 %v216
    %v473 = vunpack.c.l.b16 %v217
    %v474 = vunpack.c.l.b16 %v218
    %v475 = vunpack.c.l.b16 %v219
    %v476 = vunpack.c.l.b16 %v220
    %v477 = vunpack.c.l.b16 %v221
    %v478 = vunpack.c.l.b16 %v222
    %v479 = vpack.c.b16 %v352, %v351
    %v480 = vpack.c.b16 %v354, %v353
    %v481 = vpack.c.b16 %v356, %v355
    %v482 = vpack.c.b16 %v358, %v357
    %v483 = vpack.c.b16 %v360, %v359
    %v484 = vpack.c.b16 %v362, %v361
    %v485 = vpack.c.b16 %v364, %v363
    %v486 = vpack.c.b16 %v366, %v365
    %v487 = vpack.c.b16 %v368, %v367
    %v488 = vpack.c.b16 %v370, %v369
    %v489 = vpack.c.b16 %v372, %v371
    %v490 = vpack.c.b16 %v374, %v373
    %v491 = vpack.c.b16 %v376, %v375
    %v492 = vpack.c.b16 %v378, %v377
    %v493 = vpack.c.b16 %v380, %v379
    %v494 = vpack.c.b16 %v382, %v381
    %v495 = vpack.c.b16 %v384, %v383
    %v496 = vpack.c.b16 %v386, %v385
    %v497 = vpack.c.b16 %v388, %v387
    %v498 = vpack.c.b16 %v390, %v389
    %v499 = vpack.c.b16 %v392, %v391
    %v500 = vpack.c.b16 %v394, %v393
    %v501 = vpack.c.b16 %v396, %v395
    %v502 = vpack.c.b16 %v398, %v397
    %v503 = vpack.c.b16 %v400, %v399
    %v504 = vpack.c.b16 %v402, %v401
    %v505 = vpack.c.b16 %v404, %v403
    %v506 = vpack.c.b16 %v406, %v405
    %v507 = vpack.c.b16 %v408, %v407
    %v508 = vpack.c.b16 %v410, %v409
    %v509 = vpack.c.b16 %v412, %v411
    %v510 = vpack.c.b16 %v414, %v413
    %v511 = vpack.c.b16 %v416, %v415
    %v512 = vpack.c.b16 %v418, %v417
    %v513 = vpack.c.b16 %v420, %v419
    %v514 = vpack.c.b16 %v422, %v421
    %v515 = vpack.c.b16 %v424, %v423
    %v516 = vpack.c.b16 %v426, %v425
    %v517 = vpack.c.b16 %v428, %v427
    %v518 = vpack.c.b16 %v430, %v429
    %v519 = vpack.c.b16 %v432, %v431
    %v520 = vpack.c.b16 %v434, %v433
    %v521 = vpack.c.b16 %v436, %v435
    %v522 = vpack.c.b16 %v438, %v437
    %v523 = vpack.c.b16 %v440, %v439
    %v524 = vpack.c.b16 %v442, %v441
    %v525 = vpack.c.b16 %v444, %v443
    %v526 = vpack.c.b16 %v446, %v445
    %v527 = vpack.c.b16 %v448, %v447
    %v528 = vpack.c.b16 %v450, %v449
    %v529 = vpack.c.b16 %v452, %v451
    %v530 = vpack.c.b16 %v454, %v453
    %v531 = vpack.c.b16 %v456, %v455
    %v532 = vpack.c.b16 %v458, %v457
    %v533 = vpack.c.b16 %v460, %v459
    %v534 = vpack.c.b16 %v462, %v461
    %v535 = vpack.c.b16 %v464, %v463
    %v536 = vpack.c.b16 %v466, %v465
    %v537 = vpack.c.b16 %v468, %v467
    %v538 = vpack.c.b16 %v470, %v469
    %v539 = vpack.c.b16 %v472, %v471
    %v540 = vpack.c.b16 %v474, %v473
    %v541 = vpack.c.b16 %v476, %v475
    %v542 = vpack.c.b16 %v478, %v477
    %607 = vmatprep.subr.bf16.mxu0 0
    %608 = vmatpush1.bf16.msra.mxu0 %v486
    %609 = vmatprep.subr.bf16.mxu0 0
    %610 = vmatpush1.bf16.msra.mxu0 %v485
    %611 = vmatprep.subr.bf16.mxu0 0
    %612 = vmatpush1.bf16.msra.mxu0 %v484
    %613 = vmatprep.subr.bf16.mxu0 0
    %614 = vmatpush1.bf16.msra.mxu0 %v483
    %615 = vmatprep.subr.bf16.mxu0 0
    %616 = vmatpush1.bf16.msra.mxu0 %v482
    %617 = vmatprep.subr.bf16.mxu0 0
    %618 = vmatpush1.bf16.msra.mxu0 %v481
    %619 = vmatprep.subr.bf16.mxu0 0
    %620 = vmatpush1.bf16.msra.mxu0 %v480
    %621 = vmatprep.subr.bf16.mxu0 0
    %622 = vmatpush1.bf16.msra.mxu0 %v479
    %623 = vmatprep.subr.bf16.mxu0 0
    %624 = vmatpush2.bf16.msra.mxu0 %v494
    %625 = vmatprep.subr.bf16.mxu0 0
    %626 = vmatpush2.bf16.msra.mxu0 %v493
    %627 = vmatprep.subr.bf16.mxu0 0
    %628 = vmatpush2.bf16.msra.mxu0 %v492
    %629 = vmatprep.subr.bf16.mxu0 0
    %630 = vmatpush2.bf16.msra.mxu0 %v491
    %631 = vmatprep.subr.bf16.mxu0 0
    %632 = vmatpush2.bf16.msra.mxu0 %v490
    %633 = vmatprep.subr.bf16.mxu0 0
    %634 = vmatpush2.bf16.msra.mxu0 %v489
    %635 = vmatprep.subr.bf16.mxu0 0
    %636 = vmatpush2.bf16.msra.mxu0 %v488
    %637 = vmatprep.subr.bf16.mxu0 0
    %638 = vmatpush2.bf16.msra.mxu0 %v487
    %639 = vmatprep.mubr.bf16.mxu0 %v88
    %640 = vmatmul.mubr.bf16.gmra.mxu0 %v87
    %v641 = vpop.f32.mrf.mxu0
    %v642 = vadd.f32 0.0, %v641
    %v643 = vpop.f32.mrf.mxu0
    %v644 = vpop.f32.mrf.mxu0
    %v645 = vadd.f32 0.0, %v644
    %v646 = vpop.f32.mrf.mxu0
    %647 = vdwg.mxu0
    %648 = vmatprep.subr.bf16.mxu0 0
    %649 = vmatpush1.bf16.msra.mxu0 %v502
    %650 = vmatprep.subr.bf16.mxu0 0
    %651 = vmatpush1.bf16.msra.mxu0 %v501
    %652 = vmatprep.subr.bf16.mxu0 0
    %653 = vmatpush1.bf16.msra.mxu0 %v500
    %654 = vmatprep.subr.bf16.mxu0 0
    %655 = vmatpush1.bf16.msra.mxu0 %v499
    %656 = vmatprep.subr.bf16.mxu0 0
    %657 = vmatpush1.bf16.msra.mxu0 %v498
    %658 = vmatprep.subr.bf16.mxu0 0
    %659 = vmatpush1.bf16.msra.mxu0 %v497
    %660 = vmatprep.subr.bf16.mxu0 0
    %661 = vmatpush1.bf16.msra.mxu0 %v496
    %662 = vmatprep.subr.bf16.mxu0 0
    %663 = vmatpush1.bf16.msra.mxu0 %v495
    %664 = vmatprep.subr.bf16.mxu0 0
    %665 = vmatpush2.bf16.msra.mxu0 %v510
    %666 = vmatprep.subr.bf16.mxu0 0
    %667 = vmatpush2.bf16.msra.mxu0 %v509
    %668 = vmatprep.subr.bf16.mxu0 0
    %669 = vmatpush2.bf16.msra.mxu0 %v508
    %670 = vmatprep.subr.bf16.mxu0 0
    %671 = vmatpush2.bf16.msra.mxu0 %v507
    %672 = vmatprep.subr.bf16.mxu0 0
    %673 = vmatpush2.bf16.msra.mxu0 %v506
    %674 = vmatprep.subr.bf16.mxu0 0
    %675 = vmatpush2.bf16.msra.mxu0 %v505
    %676 = vmatprep.subr.bf16.mxu0 0
    %677 = vmatpush2.bf16.msra.mxu0 %v504
    %678 = vmatprep.subr.bf16.mxu0 0
    %679 = vmatpush2.bf16.msra.mxu0 %v503
    %680 = vmatprep.mubr.bf16.mxu0 %v90
    %681 = vmatmul.mubr.bf16.gmra.mxu0 %v89
    %v682 = vpop.f32.mrf.mxu0
    %v683 = vadd.f32 %v642, %v682
    %v684 = vpop.f32.mrf.mxu0
    %v685 = vpop.f32.mrf.mxu0
    %v686 = vadd.f32 %v645, %v685
    %v687 = vpop.f32.mrf.mxu0
    %688 = vdwg.mxu0
    %689 = vmatprep.subr.bf16.mxu0 0
    %690 = vmatpush1.bf16.msra.mxu0 %v518
    %691 = vmatprep.subr.bf16.mxu0 0
    %692 = vmatpush1.bf16.msra.mxu0 %v517
    %693 = vmatprep.subr.bf16.mxu0 0
    %694 = vmatpush1.bf16.msra.mxu0 %v516
    %695 = vmatprep.subr.bf16.mxu0 0
    %696 = vmatpush1.bf16.msra.mxu0 %v515
    %697 = vmatprep.subr.bf16.mxu0 0
    %698 = vmatpush1.bf16.msra.mxu0 %v514
    %699 = vmatprep.subr.bf16.mxu0 0
    %700 = vmatpush1.bf16.msra.mxu0 %v513
    %701 = vmatprep.subr.bf16.mxu0 0
    %702 = vmatpush1.bf16.msra.mxu0 %v512
    %703 = vmatprep.subr.bf16.mxu0 0
    %704 = vmatpush1.bf16.msra.mxu0 %v511
    %705 = vmatprep.subr.bf16.mxu0 0
    %706 = vmatpush2.bf16.msra.mxu0 %v526
    %707 = vmatprep.subr.bf16.mxu0 0
    %708 = vmatpush2.bf16.msra.mxu0 %v525
    %709 = vmatprep.subr.bf16.mxu0 0
    %710 = vmatpush2.bf16.msra.mxu0 %v524
    %711 = vmatprep.subr.bf16.mxu0 0
    %712 = vmatpush2.bf16.msra.mxu0 %v523
    %713 = vmatprep.subr.bf16.mxu0 0
    %714 = vmatpush2.bf16.msra.mxu0 %v522
    %715 = vmatprep.subr.bf16.mxu0 0
    %716 = vmatpush2.bf16.msra.mxu0 %v521
    %717 = vmatprep.subr.bf16.mxu0 0
    %718 = vmatpush2.bf16.msra.mxu0 %v520
    %719 = vmatprep.subr.bf16.mxu0 0
    %720 = vmatpush2.bf16.msra.mxu0 %v519
    %721 = vmatprep.mubr.bf16.mxu0 %v92
    %722 = vmatmul.mubr.bf16.gmra.mxu0 %v91
    %v723 = vpop.f32.mrf.mxu0
    %v724 = vadd.f32 %v683, %v723
    %v725 = vpop.f32.mrf.mxu0
    %v726 = vpop.f32.mrf.mxu0
    %v727 = vadd.f32 %v686, %v726
    %v728 = vpop.f32.mrf.mxu0
    %729 = vdwg.mxu0
    %730 = vmatprep.subr.bf16.mxu0 0
    %731 = vmatpush1.bf16.msra.mxu0 %v534
    %732 = vmatprep.subr.bf16.mxu0 0
    %733 = vmatpush1.bf16.msra.mxu0 %v533
    %734 = vmatprep.subr.bf16.mxu0 0
    %735 = vmatpush1.bf16.msra.mxu0 %v532
    %736 = vmatprep.subr.bf16.mxu0 0
    %737 = vmatpush1.bf16.msra.mxu0 %v531
    %738 = vmatprep.subr.bf16.mxu0 0
    %739 = vmatpush1.bf16.msra.mxu0 %v530
    %740 = vmatprep.subr.bf16.mxu0 0
    %741 = vmatpush1.bf16.msra.mxu0 %v529
    %742 = vmatprep.subr.bf16.mxu0 0
    %743 = vmatpush1.bf16.msra.mxu0 %v528
    %744 = vmatprep.subr.bf16.mxu0 0
    %745 = vmatpush1.bf16.msra.mxu0 %v527
    %746 = vmatprep.subr.bf16.mxu0 0
    %747 = vmatpush2.bf16.msra.mxu0 %v542
    %748 = vmatprep.subr.bf16.mxu0 0
    %749 = vmatpush2.bf16.msra.mxu0 %v541
    %750 = vmatprep.subr.bf16.mxu0 0
    %751 = vmatpush2.bf16.msra.mxu0 %v540
    %752 = vmatprep.subr.bf16.mxu0 0
    %753 = vmatpush2.bf16.msra.mxu0 %v539
    %754 = vmatprep.subr.bf16.mxu0 0
    %755 = vmatpush2.bf16.msra.mxu0 %v538
    %756 = vmatprep.subr.bf16.mxu0 0
    %757 = vmatpush2.bf16.msra.mxu0 %v537
    %758 = vmatprep.subr.bf16.mxu0 0
    %759 = vmatpush2.bf16.msra.mxu0 %v536
    %760 = vmatprep.subr.bf16.mxu0 0
    %761 = vmatpush2.bf16.msra.mxu0 %v535
    %762 = vmatprep.mubr.bf16.mxu0 %v94
    %763 = vmatmul.mubr.bf16.gmra.mxu0 %v93
    %v764 = vpop.f32.mrf.mxu0
    %v765 = vadd.f32 %v724, %v764
    %v766 = vpop.f32.mrf.mxu0
    %v767 = vpop.f32.mrf.mxu0
    %v768 = vadd.f32 %v727, %v767
    %v769 = vpop.f32.mrf.mxu0
    %770 = vdwg.mxu0
    %v771 = vadd.f32 %v69, %v765
    %v772 = vadd.f32 %v70, %v768
    %773 = vst [vmem:[#allocation2] sm:$0xff] %v771
    %774 = vst [vmem:[#allocation2 + $0x8] sm:$0xff] %v772
    // Predicated region
    $region38: #{tpu_custom_call.1} parent=1 // pred_check
      %p775 = pneg %p63
    $region39: #{tpu_custom_call.1} parent=1 // pred_check_branch
      %777 = sbr.rel (%p775) target = $region41
    $region40: #{tpu_custom_call.1} parent=1 // pred_region
      %v778 = vld [vmem:[#allocation2] sm:$0xff]
      %v779 = vld [vmem:[#allocation2 + $0x8] sm:$0xff]
      %v780 = vld [vmem:[%s2] sm:$0x1]
      %v782 = vlaneseq
      %v783 = vshrl.u32 %v782, 7
      %v784 = vsub.s32 0, %v783
      %v785 = vrot.slane %v780, %v784
      %v787 = vadd.f32 %v778, %v785
      %v788 = vadd.f32 %v779, %v785
      %v789 = vmax.f32 %v787, 0.0
      %v790 = vmax.f32 %v788, 0.0
      %v791 = vpack.c.bf16 %v790, %v789
      %v792 = vld [vmem:[#allocation8] sm:$0xf]
      %v793 = vld [vmem:[#allocation8 + $0x4] sm:$0xf]
      %v794 = vld [vmem:[#allocation8 + $0x8] sm:$0xf]
      %v795 = vld [vmem:[#allocation8 + $0xc] sm:$0xf]
      %v796 = vld [vmem:[#allocation8 + $0x10] sm:$0xf]
      %v797 = vld [vmem:[#allocation8 + $0x14] sm:$0xf]
      %v798 = vld [vmem:[#allocation8 + $0x18] sm:$0xf]
      %v799 = vld [vmem:[#allocation8 + $0x1c] sm:$0xf]
      %v800 = vld [vmem:[#allocation8 + $0x20] sm:$0xf]
      %v801 = vld [vmem:[#allocation8 + $0x24] sm:$0xf]
      %v802 = vld [vmem:[#allocation8 + $0x28] sm:$0xf]
      %v803 = vld [vmem:[#allocation8 + $0x2c] sm:$0xf]
      %v804 = vld [vmem:[#allocation8 + $0x30] sm:$0xf]
      %v805 = vld [vmem:[#allocation8 + $0x34] sm:$0xf]
      %v806 = vld [vmem:[#allocation8 + $0x38] sm:$0xf]
      %v807 = vld [vmem:[#allocation8 + $0x3c] sm:$0xf]
      %v808 = vld [vmem:[%s4] sm:$0x1]
      %v810 = vlaneseq
      %v811 = vshrl.u32 %v810, 7
      %v812 = vsub.s32 0, %v811
      %v813 = vrot.slane %v808, %v812
      %v831 = vunpack.c.l.b16 %v792
      %v832 = vunpack.c.l.b16 %v793
      %v833 = vunpack.c.l.b16 %v794
      %v834 = vunpack.c.l.b16 %v795
      %v835 = vunpack.c.l.b16 %v796
      %v836 = vunpack.c.l.b16 %v797
      %v837 = vunpack.c.l.b16 %v798
      %v838 = vunpack.c.l.b16 %v799
      %v839 = vunpack.c.l.b16 %v800
      %v840 = vunpack.c.l.b16 %v801
      %v841 = vunpack.c.l.b16 %v802
      %v842 = vunpack.c.l.b16 %v803
      %v843 = vunpack.c.l.b16 %v804
      %v844 = vunpack.c.l.b16 %v805
      %v845 = vunpack.c.l.b16 %v806
      %v846 = vunpack.c.l.b16 %v807
      %v847 = vpack.c.b16 %v832, %v831
      %v848 = vpack.c.b16 %v834, %v833
      %v849 = vpack.c.b16 %v836, %v835
      %v850 = vpack.c.b16 %v838, %v837
      %v851 = vpack.c.b16 %v840, %v839
      %v852 = vpack.c.b16 %v842, %v841
      %v853 = vpack.c.b16 %v844, %v843
      %v854 = vpack.c.b16 %v846, %v845
      %863 = vmatprep.subr.bf16.mxu0 0
      %864 = vmatpush1.bf16.msra.mxu0 %v854
      %865 = vmatprep.subr.bf16.mxu0 0
      %866 = vmatpush1.bf16.msra.mxu0 %v853
      %867 = vmatprep.subr.bf16.mxu0 0
      %868 = vmatpush1.bf16.msra.mxu0 %v852
      %869 = vmatprep.subr.bf16.mxu0 0
      %870 = vmatpush1.bf16.msra.mxu0 %v851
      %871 = vmatprep.subr.bf16.mxu0 0
      %872 = vmatpush1.bf16.msra.mxu0 %v850
      %873 = vmatprep.subr.bf16.mxu0 0
      %874 = vmatpush1.bf16.msra.mxu0 %v849
      %875 = vmatprep.subr.bf16.mxu0 0
      %876 = vmatpush1.bf16.msra.mxu0 %v848
      %877 = vmatprep.subr.bf16.mxu0 0
      %878 = vmatpush1.bf16.msra.mxu0 %v847
      %879 = vmatprep.subr.bf16.mxu0 0
      %880 = vmatpush2.bf16.msra.mxu0 0
      %881 = vmatprep.subr.bf16.mxu0 0
      %882 = vmatpush2.bf16.msra.mxu0 0
      %883 = vmatprep.subr.bf16.mxu0 0
      %884 = vmatpush2.bf16.msra.mxu0 0
      %885 = vmatprep.subr.bf16.mxu0 0
      %886 = vmatpush2.bf16.msra.mxu0 0
      %887 = vmatprep.subr.bf16.mxu0 0
      %888 = vmatpush2.bf16.msra.mxu0 0
      %889 = vmatprep.subr.bf16.mxu0 0
      %890 = vmatpush2.bf16.msra.mxu0 0
      %891 = vmatprep.subr.bf16.mxu0 0
      %892 = vmatpush2.bf16.msra.mxu0 0
      %893 = vmatprep.subr.bf16.mxu0 0
      %894 = vmatpush2.bf16.msra.mxu0 0
      %895 = vmatprep.mubr.bf16.mxu0 0
      %896 = vmatmul.mubr.bf16.gmra.mxu0 %v791
      %v897 = vpop.f32.mrf.mxu0
      %v898 = vadd.f32 %v813, %v897
      %v899 = vpop.f32.mrf.mxu0
      %v900 = vpop.f32.mrf.mxu0
      %v901 = vadd.f32 %v813, %v900
      %v902 = vpop.f32.mrf.mxu0
      %903 = vdwg.mxu0
      %v904 = vmax.f32 %v898, 0.0
      %v905 = vmax.f32 %v901, 0.0
      %906 = vst [vmem:[#allocation9] sm:$0xff] %v904
      %907 = vst [vmem:[#allocation9 + $0x8] sm:$0xff] %v905
    $region41: #{tpu_custom_call.1} parent=1 // pred_fallthru
      _
    // Predicated region
    $region42: #{tpu_custom_call.1} parent=1 // pred_check
      _
    $region43: #{tpu_custom_call.1} parent=1 // pred_check_branch
      %909 = sbr.rel (0) target = $region45
    $region44: #{tpu_custom_call.1} parent=1 // pred_region
      %s911 = ssub.s32 256, 256
      %912 = vsyncadd [#allocation5], %s911
      %s913 = sshll.u32 [#allocation9], 4
      %s914 = int_to_ptr.vmem [resolvable:$true] %s913
      %919 = dma.vmem_to_hbm [thread:$0]  %s914, 256, %s5, [#allocation5], 128, 128, 8
    $region45: #{tpu_custom_call.1} parent=1 // pred_fallthru
      _
    // Predicated region
    $region46: #{tpu_custom_call.1} parent=1 // pred_check
      _
    $region47: #{tpu_custom_call.1} parent=1 // pred_check_branch
      %921 = sbr.rel (0) target = $region49
    $region48: #{tpu_custom_call.1} parent=1 // pred_region
      %922 = dma.done [#allocation5], 256
    $region49: #{tpu_custom_call.1} parent=1 // pred_fallthru
      _
    %923 = vsyncpa [#allocation4], 1
    %924 = vsyncpa [#allocation7], 1
    %925 = vsyncpa [#allocation5], 1

</llo_original>
